<compile_context>
chip_gen: v7x
topology: tpu7x:2x2x1
jax: 0.10.0
libtpu: 0.0.40
codegen_flags: <defaults>
</compile_context>

<pallas_src>
import functools

import jax
import jax.numpy as jnp
from jax import lax
from jax.experimental import pallas as pl
from jax.experimental.pallas import tpu as pltpu

BATCH_PAD = 8  # pad batch to one full sublane tile


# ------------------------- fused encoder + head kernel -----------------------
def fused_tokenchar_gru_kernel(
    x_ref,        # (T*Bp, 2E) bf16  time-major flattened embedded inputs [tok_emb | chr_emb]
    lenmap_ref,   # (Bp, 2H)   int32: col j < H -> token_len[b], else char_len[b]
    h0_ref,       # (Bp, 2H)   f32   [h0_tok | h0_chr]
    wih_ref,      # (2E, GW)   bf16  merged gates [r|z|n|pad], each gate block-diag(tok,chr)
    whh_ref,      # (2H, GW)   bf16  merged gates [r|z|n|pad]
    bx_ref,       # (1, GW)    f32   [b_ih_r+b_hh_r | b_ih_z+b_hh_z | b_ih_n | 0]
    bhn_ref,      # (1, 2H)    f32   b_hh_n (stays inside the reset term)
    w1_ref, b1_ref,                    # (2H, H), (1, H)   alpha_fc layer 1
    w2_ref, b2_ref,                    # (1, H),  (1, 1)   alpha_fc layer 2 (row vector)
    wo_ref, bo_ref,                    # (H, O),  (1, O)   output_fc
    out_ref,                           # (Bp, O)  f32
    gx_ref,                            # scratch (T*Bp, GW) f32
    *, seq_len, batch_pad, hidden_size,
):
    T, Bp, H = seq_len, batch_pad, hidden_size
    twoH = 2 * H

    # ---- prologue: single hoisted input projection (one matmul, one scratch store stream)
    gx_ref[...] = (
        jnp.dot(x_ref[...], wih_ref[...], preferred_element_type=jnp.float32)
        + bx_ref[...]
    )

    # hoisted loop-invariants (small: whh is 8 bf16 vregs; broadcast hoisted, not re-emitted
    # per unrolled iteration since JAX does not CSE broadcast_in_dim)
    lenmap = lenmap_ref[...]
    whh = whh_ref[...]
    bhn = jnp.broadcast_to(bhn_ref[...], (Bp, twoH))

    # ---- widened recurrence: h = [h_tok | h_chr] (f32), carried in registers, unrolled
    def step(t, h):
        row = pl.multiple_of(t * Bp, Bp)
        gx = gx_ref[pl.ds(row, Bp), :]                                   # (Bp, GW) f32
        gh = jnp.dot(h.astype(jnp.bfloat16), whh,
                     preferred_element_type=jnp.float32)                 # (Bp, GW) f32
        # one sigmoid over the adjacent 128-lane [r|z] block
        rz = jax.nn.sigmoid(gx[:, :2 * twoH] + gh[:, :2 * twoH])
        r = rz[:, :twoH]
        z = rz[:, twoH:2 * twoH]
        n = jnp.tanh(gx[:, 2 * twoH:3 * twoH]
                     + r * (gh[:, 2 * twoH:3 * twoH] + bhn))
        # packed-sequence semantics folded into the update gate: frozen rows get z=1
        z_eff = jnp.where(lenmap > t, z, 1.0)
        return (1.0 - z_eff) * n + z_eff * h

    h = lax.fori_loop(0, T, step, h0_ref[...], unroll=True)

    # ---- fusion head: h already equals torch.cat((token, char), dim=1)
    h1 = jnp.maximum(
        jnp.dot(h, w1_ref[...], preferred_element_type=jnp.float32) + b1_ref[...], 0.0)
    # Linear(H, 1) as VPU multiply + lane reduction (avoid an N=1 MXU matmul)
    alpha = jax.nn.sigmoid(
        jnp.sum(h1 * w2_ref[...], axis=-1, keepdims=True) + b2_ref[...])     # (Bp, 1)
    tok_h = h[:, :H]
    chr_h = h[:, H:]
    weighted = tok_h * alpha + chr_h * (1.0 - alpha)                          # (Bp, H)
    out_ref[...] = jnp.dot(weighted, wo_ref[...],
                           preferred_element_type=jnp.float32) + bo_ref[...]


# ------------------------------- parameter prep ------------------------------
def _block_diag2(a, b):
    za = jnp.zeros((a.shape[0], b.shape[1]), a.dtype)
    zb = jnp.zeros((b.shape[0], a.shape[1]), a.dtype)
    return jnp.concatenate(
        [jnp.concatenate([a, za], axis=1), jnp.concatenate([zb, b], axis=1)], axis=0)


def init_gru_encoder_params(key, vocab_size, emb_size, hidden_size, batch_size):
    ks = jax.random.split(key, 6)
    H, E = hidden_size, emb_size
    emb = jax.random.normal(ks[0], (vocab_size, E), jnp.float32) * 0.1
    w_ih_t = jax.random.normal(ks[1], (E, 3 * H), jnp.float32) * 0.1   # (in, 3H), gates [r|z|n]
    w_hh_t = jax.random.normal(ks[2], (H, 3 * H), jnp.float32) * 0.1
    b_ih = jax.random.normal(ks[3], (3 * H,), jnp.float32) * 0.1
    b_hh = jax.random.normal(ks[4], (3 * H,), jnp.float32) * 0.1
    # deterministic "xavier-normal" h0 (num_layers=1 squeezed away)
    gain = jnp.sqrt(2.0 / (batch_size * H + H))
    h0 = jax.random.normal(ks[5], (batch_size, H), jnp.float32) * gain
    return dict(emb=emb, w_ih_t=w_ih_t, w_hh_t=w_hh_t, b_ih=b_ih, b_hh=b_hh, h0=h0)


def prepare_fused_params(params, hidden_size, batch_pad=BATCH_PAD):
    """One-time re-layout of the module parameters for the fused merged-gate kernel."""
    H = hidden_size
    twoH = 2 * H
    G3 = 3 * twoH
    GW = ((G3 + 127) // 128) * 128            # pad merged gate axis to a 128-lane multiple
    tok, chr_ = params["token"], params["char"]

    def wgate(wt, g):
        return wt[:, g * H:(g + 1) * H]

    def bgate(b, g):
        return b[g * H:(g + 1) * H]

    # merged, block-diagonal, lane-padded weights (bf16 for the MXU)
    wih = jnp.concatenate(
        [_block_diag2(wgate(tok["w_ih_t"], g), wgate(chr_["w_ih_t"], g)) for g in range(3)],
        axis=1)                                                           # (2E, 3*2H)
    whh = jnp.concatenate(
        [_block_diag2(wgate(tok["w_hh_t"], g), wgate(chr_["w_hh_t"], g)) for g in range(3)],
        axis=1)                                                           # (2H, 3*2H)
    wih = jnp.pad(wih, ((0, 0), (0, GW - G3))).astype(jnp.bfloat16)       # (2E, GW)
    whh = jnp.pad(whh, ((0, 0), (0, GW - G3))).astype(jnp.bfloat16)       # (2H, GW)

    # fold b_hh into the precomputed GX for r/z gates; keep b_hh_n inside the reset term
    b_r = jnp.concatenate([bgate(tok["b_ih"], 0) + bgate(tok["b_hh"], 0),
                           bgate(chr_["b_ih"], 0) + bgate(chr_["b_hh"], 0)])
    b_z = jnp.concatenate([bgate(tok["b_ih"], 1) + bgate(tok["b_hh"], 1),
                           bgate(chr_["b_ih"], 1) + bgate(chr_["b_hh"], 1)])
    b_in = jnp.concatenate([bgate(tok["b_ih"], 2), bgate(chr_["b_ih"], 2)])
    bx = jnp.pad(jnp.concatenate([b_r, b_z, b_in]), (0, GW - G3))[None, :]   # (1, GW) f32
    bhn = jnp.concatenate([bgate(tok["b_hh"], 2), bgate(chr_["b_hh"], 2)])[None, :]  # (1, 2H)

    h0 = jnp.concatenate([tok["h0"], chr_["h0"]], axis=1)                   # (B, 2H)
    h0 = jnp.pad(h0, ((0, batch_pad - h0.shape[0]), (0, 0)))                # (Bp, 2H)

    return dict(
        wih=wih, whh=whh, bx=bx, bhn=bhn, h0=h0,
        w1=params["alpha_w1_t"],                  # (2H, H) -- concat order [tok|chr]
        b1=params["alpha_b1"][None, :],           # (1, H)
        w2row=params["alpha_w2_t"].T,             # (1, H)
        b2=params["alpha_b2"].reshape(1, 1),      # (1, 1)
        wo=params["out_w_t"],                     # (H, O)
        bo=params["out_b"][None, :],              # (1, O)
        emb_tok=tok["emb"], emb_chr=chr_["emb"])


# --------------------------------- forward -----------------------------------
@jax.jit
def token_char_forward(fused, token_seq, token_len, char_seq, char_len):
    B, T_tok = token_seq.shape
    _, T_chr = char_seq.shape
    T = max(T_tok, T_chr)
    Bp = fused["h0"].shape[0]
    twoH = fused["h0"].shape[1]
    H = twoH // 2
    GW = fused["wih"].shape[1]
    O = fused["wo"].shape[1]

    # embedding lookups (glue), gathered time-major directly, padded to common (T, Bp, .)
    x_tok = jnp.take(fused["emb_tok"], token_seq.T, axis=0)                  # (T_tok, B, E)
    x_chr = jnp.take(fused["emb_chr"], char_seq.T, axis=0)                   # (T_chr, B, E)
    x_tok = jnp.pad(x_tok, ((0, T - T_tok), (0, Bp - B), (0, 0)))
    x_chr = jnp.pad(x_chr, ((0, T - T_chr), (0, Bp - B), (0, 0)))
    x = jnp.concatenate([x_tok, x_chr], axis=-1)                             # (T, Bp, 2E)
    x = x.reshape(T * Bp, -1).astype(jnp.bfloat16)                           # time-major flat

    lenmap = jnp.concatenate(
        [jnp.broadcast_to(token_len[:, None], (B, H)),
         jnp.broadcast_to(char_len[:, None], (B, H))], axis=1).astype(jnp.int32)
    lenmap = jnp.pad(lenmap, ((0, Bp - B), (0, 0)))                          # (Bp, 2H)

    vmem = pl.BlockSpec(memory_space=pltpu.MemorySpace.VMEM)
    kernel = functools.partial(fused_tokenchar_gru_kernel,
                               seq_len=T, batch_pad=Bp, hidden_size=H)
    out = pl.pallas_call(
        kernel,
        out_shape=jax.ShapeDtypeStruct((Bp, O), jnp.float32),
        in_specs=[vmem] * 13,
        out_specs=vmem,
        scratch_shapes=[pltpu.VMEM((T * Bp, GW), jnp.float32)],
        compiler_params=pltpu.CompilerParams(vmem_limit_bytes=32 * 1024 * 1024),
    )(x, lenmap, fused["h0"],
      fused["wih"], fused["whh"], fused["bx"], fused["bhn"],
      fused["w1"], fused["b1"], fused["w2row"], fused["b2"],
      fused["wo"], fused["bo"])
    return out[:B]


# ----------------------------------- main -------------------------------------
if __name__ == "__main__":
    B = 2
    TOKEN_VOCAB, CHAR_VOCAB = 50, 30
    HIDDEN, EMB, OUT = 32, 48, 16
    T_TOK, T_CHR = 8, 12

    root = jax.random.PRNGKey(0)
    k_tok, k_chr, k_a1, k_a2, k_a3, k_a4, k_o1, k_o2, k_d1, k_d2 = jax.random.split(root, 10)

    params = {
        "token": init_gru_encoder_params(k_tok, TOKEN_VOCAB, EMB, HIDDEN, B),
        "char": init_gru_encoder_params(k_chr, CHAR_VOCAB, EMB, HIDDEN, B),
        # alpha_fc = Linear(2H, H) -> ReLU -> Linear(H, 1) -> Sigmoid   (pre-transposed)
        "alpha_w1_t": jax.random.normal(k_a1, (2 * HIDDEN, HIDDEN), jnp.float32) * 0.1,
        "alpha_b1": jax.random.normal(k_a2, (HIDDEN,), jnp.float32) * 0.1,
        "alpha_w2_t": jax.random.normal(k_a3, (HIDDEN, 1), jnp.float32) * 0.1,
        "alpha_b2": jax.random.normal(k_a4, (1,), jnp.float32) * 0.1,
        # output_fc = Linear(H, O)
        "out_w_t": jax.random.normal(k_o1, (HIDDEN, OUT), jnp.float32) * 0.1,
        "out_b": jax.random.normal(k_o2, (OUT,), jnp.float32) * 0.1,
    }
    fused = prepare_fused_params(params, HIDDEN, BATCH_PAD)

    token_seq = jax.random.randint(k_d1, (B, T_TOK), 0, TOKEN_VOCAB, dtype=jnp.int32)
    char_seq = jax.random.randint(k_d2, (B, T_CHR), 0, CHAR_VOCAB, dtype=jnp.int32)
    token_len = jnp.array([T_TOK, 5], dtype=jnp.int32)
    char_len = jnp.array([10, T_CHR], dtype=jnp.int32)

    out = token_char_forward(fused, token_seq, token_len, char_seq, char_len)
    out = jax.block_until_ready(out)
    assert out.shape == (B, OUT) and out.dtype == jnp.float32
    assert bool(jnp.all(jnp.isfinite(out)))
    print("KERNEL_OK")
</pallas_src>

<mosaic_0001>
module attributes {stable_mosaic.version = 11 : i64} {
  func.func @fused_tokenchar_gru_kernel(%arg0: memref<96x96xbf16, #tpu.memory_space<vmem>>, %arg1: memref<8x64xi32, #tpu.memory_space<vmem>>, %arg2: memref<8x64xf32, #tpu.memory_space<vmem>>, %arg3: memref<96x256xbf16, #tpu.memory_space<vmem>>, %arg4: memref<64x256xbf16, #tpu.memory_space<vmem>>, %arg5: memref<1x256xf32, #tpu.memory_space<vmem>>, %arg6: memref<1x64xf32, #tpu.memory_space<vmem>>, %arg7: memref<64x32xf32, #tpu.memory_space<vmem>>, %arg8: memref<1x32xf32, #tpu.memory_space<vmem>>, %arg9: memref<1x32xf32, #tpu.memory_space<vmem>>, %arg10: memref<1x1xf32, #tpu.memory_space<vmem>>, %arg11: memref<32x16xf32, #tpu.memory_space<vmem>>, %arg12: memref<1x16xf32, #tpu.memory_space<vmem>>, %arg13: memref<8x16xf32, #tpu.memory_space<vmem>>, %arg14: memref<96x256xf32, #tpu.memory_space<vmem>>) attributes {dimension_semantics = [], scalar_prefetch = 0 : i64, scratch_operands = 1 : i64, tpu.core_type = #tpu.core_type<tc>} {
    %c0 = arith.constant 0 : index
    %c0_0 = arith.constant 0 : index
    %0 = vector.load %arg0[%c0, %c0_0] : memref<96x96xbf16, #tpu.memory_space<vmem>>, vector<96x96xbf16>
    %c0_1 = arith.constant 0 : index
    %c0_2 = arith.constant 0 : index
    %1 = vector.load %arg3[%c0_1, %c0_2] : memref<96x256xbf16, #tpu.memory_space<vmem>>, vector<96x256xbf16>
    %cst = arith.constant dense<0.000000e+00> : vector<96x256xf32>
    %2 = tpu.matmul %0, %1, %cst {dimension_numbers = #tpu.dot_dimension_numbers<[1], [0], [0], [1], [0, 0, 1, 1], [], []>} : vector<96x96xbf16>, vector<96x256xbf16>, vector<96x256xf32> -> vector<96x256xf32>
    %c0_3 = arith.constant 0 : index
    %c0_4 = arith.constant 0 : index
    %3 = vector.load %arg5[%c0_3, %c0_4] : memref<1x256xf32, #tpu.memory_space<vmem>>, vector<1x256xf32>
    %4 = vector.broadcast %3 : vector<1x256xf32> to vector<96x256xf32>
    %5 = arith.addf %2, %4 : vector<96x256xf32>
    %c0_5 = arith.constant 0 : index
    %c0_6 = arith.constant 0 : index
    %6 = vector.load %arg14[%c0_5, %c0_6] : memref<96x256xf32, #tpu.memory_space<vmem>>, vector<96x256xf32>
    tpu.vector_store %arg14[%c0_5, %c0_6], %5 {strides = array<i32>} : memref<96x256xf32, #tpu.memory_space<vmem>>, vector<96x256xf32>,
    %c0_7 = arith.constant 0 : index
    %c0_8 = arith.constant 0 : index
    %7 = vector.load %arg1[%c0_7, %c0_8] : memref<8x64xi32, #tpu.memory_space<vmem>>, vector<8x64xi32>
    %c0_9 = arith.constant 0 : index
    %c0_10 = arith.constant 0 : index
    %8 = vector.load %arg4[%c0_9, %c0_10] : memref<64x256xbf16, #tpu.memory_space<vmem>>, vector<64x256xbf16>
    %c0_11 = arith.constant 0 : index
    %c0_12 = arith.constant 0 : index
    %9 = vector.load %arg6[%c0_11, %c0_12] : memref<1x64xf32, #tpu.memory_space<vmem>>, vector<1x64xf32>
    %10 = vector.shape_cast %9 : vector<1x64xf32> to vector<1x64xf32>
    %11 = vector.broadcast %10 : vector<1x64xf32> to vector<8x64xf32>
    %c0_13 = arith.constant 0 : index
    %c0_14 = arith.constant 0 : index
    %12 = vector.load %arg2[%c0_13, %c0_14] : memref<8x64xf32, #tpu.memory_space<vmem>>, vector<8x64xf32>
    %c0_i32 = arith.constant 0 : i32
    %c8_i32 = arith.constant 8 : i32
    %13 = arith.muli %c0_i32, %c8_i32 : i32
    %14 = tpu.assume_multiple %13, 8 : i32
    %15 = arith.index_cast %14 : i32 to index
    %c0_15 = arith.constant 0 : index
    %16 = vector.load %arg14[%15, %c0_15] : memref<96x256xf32, #tpu.memory_space<vmem>>, vector<8x256xf32>
    %17 = arith.truncf %12 : vector<8x64xf32> to vector<8x64xbf16>
    %cst_16 = arith.constant dense<0.000000e+00> : vector<8x256xf32>
    %18 = tpu.matmul %17, %8, %cst_16 {dimension_numbers = #tpu.dot_dimension_numbers<[1], [0], [0], [1], [0, 0, 1, 1], [], []>} : vector<8x64xbf16>, vector<64x256xbf16>, vector<8x256xf32> -> vector<8x256xf32>
    %19 = vector.extract_strided_slice %16 {offsets = [0, 0], sizes = [8, 128], strides = [1, 1]} : vector<8x256xf32> to vector<8x128xf32>
    %20 = vector.extract_strided_slice %18 {offsets = [0, 0], sizes = [8, 128], strides = [1, 1]} : vector<8x256xf32> to vector<8x128xf32>
    %21 = arith.addf %19, %20 : vector<8x128xf32>
    %22 = arith.negf %21 : vector<8x128xf32>
    %23 = math.exp %22 : vector<8x128xf32>
    %cst_17 = arith.constant 1.000000e+00 : f32
    %24 = vector.broadcast %cst_17 : f32 to vector<8x128xf32>
    %25 = arith.addf %24, %23 : vector<8x128xf32>
    %26 = arith.divf %24, %25 : vector<8x128xf32>
    %27 = vector.extract_strided_slice %26 {offsets = [0, 0], sizes = [8, 64], strides = [1, 1]} : vector<8x128xf32> to vector<8x64xf32>
    %28 = vector.extract_strided_slice %26 {offsets = [0, 64], sizes = [8, 64], strides = [1, 1]} : vector<8x128xf32> to vector<8x64xf32>
    %29 = vector.extract_strided_slice %16 {offsets = [0, 128], sizes = [8, 64], strides = [1, 1]} : vector<8x256xf32> to vector<8x64xf32>
    %30 = vector.extract_strided_slice %18 {offsets = [0, 128], sizes = [8, 64], strides = [1, 1]} : vector<8x256xf32> to vector<8x64xf32>
    %31 = arith.addf %30, %11 : vector<8x64xf32>
    %32 = arith.mulf %27, %31 : vector<8x64xf32>
    %33 = arith.addf %29, %32 : vector<8x64xf32>
    %34 = math.tanh %33 : vector<8x64xf32>
    %35 = vector.broadcast %c0_i32 : i32 to vector<8x64xi32>
    %36 = arith.cmpi sgt, %7, %35 : vector<8x64xi32>
    %cst_18 = arith.constant 1.000000e+00 : f32
    %37 = vector.broadcast %cst_18 : f32 to vector<8x64xf32>
    %38 = arith.select %36, %28, %37 : vector<8x64xi1>, vector<8x64xf32>
    %cst_19 = arith.constant 1.000000e+00 : f32
    %39 = vector.broadcast %cst_19 : f32 to vector<8x64xf32>
    %40 = arith.subf %39, %38 : vector<8x64xf32>
    %41 = arith.mulf %40, %34 : vector<8x64xf32>
    %42 = arith.mulf %38, %12 : vector<8x64xf32>
    %43 = arith.addf %41, %42 : vector<8x64xf32>
    %c1_i32 = arith.constant 1 : i32
    %c8_i32_20 = arith.constant 8 : i32
    %44 = arith.muli %c1_i32, %c8_i32_20 : i32
    %45 = tpu.assume_multiple %44, 8 : i32
    %46 = arith.index_cast %45 : i32 to index
    %c0_21 = arith.constant 0 : index
    %47 = vector.load %arg14[%46, %c0_21] : memref<96x256xf32, #tpu.memory_space<vmem>>, vector<8x256xf32>
    %48 = arith.truncf %43 : vector<8x64xf32> to vector<8x64xbf16>
    %cst_22 = arith.constant dense<0.000000e+00> : vector<8x256xf32>
    %49 = tpu.matmul %48, %8, %cst_22 {dimension_numbers = #tpu.dot_dimension_numbers<[1], [0], [0], [1], [0, 0, 1, 1], [], []>} : vector<8x64xbf16>, vector<64x256xbf16>, vector<8x256xf32> -> vector<8x256xf32>
    %50 = vector.extract_strided_slice %47 {offsets = [0, 0], sizes = [8, 128], strides = [1, 1]} : vector<8x256xf32> to vector<8x128xf32>
    %51 = vector.extract_strided_slice %49 {offsets = [0, 0], sizes = [8, 128], strides = [1, 1]} : vector<8x256xf32> to vector<8x128xf32>
    %52 = arith.addf %50, %51 : vector<8x128xf32>
    %53 = arith.negf %52 : vector<8x128xf32>
    %54 = math.exp %53 : vector<8x128xf32>
    %cst_23 = arith.constant 1.000000e+00 : f32
    %55 = vector.broadcast %cst_23 : f32 to vector<8x128xf32>
    %56 = arith.addf %55, %54 : vector<8x128xf32>
    %57 = arith.divf %55, %56 : vector<8x128xf32>
    %58 = vector.extract_strided_slice %57 {offsets = [0, 0], sizes = [8, 64], strides = [1, 1]} : vector<8x128xf32> to vector<8x64xf32>
    %59 = vector.extract_strided_slice %57 {offsets = [0, 64], sizes = [8, 64], strides = [1, 1]} : vector<8x128xf32> to vector<8x64xf32>
    %60 = vector.extract_strided_slice %47 {offsets = [0, 128], sizes = [8, 64], strides = [1, 1]} : vector<8x256xf32> to vector<8x64xf32>
    %61 = vector.extract_strided_slice %49 {offsets = [0, 128], sizes = [8, 64], strides = [1, 1]} : vector<8x256xf32> to vector<8x64xf32>
    %62 = arith.addf %61, %11 : vector<8x64xf32>
    %63 = arith.mulf %58, %62 : vector<8x64xf32>
    %64 = arith.addf %60, %63 : vector<8x64xf32>
    %65 = math.tanh %64 : vector<8x64xf32>
    %66 = vector.broadcast %c1_i32 : i32 to vector<8x64xi32>
    %67 = arith.cmpi sgt, %7, %66 : vector<8x64xi32>
    %cst_24 = arith.constant 1.000000e+00 : f32
    %68 = vector.broadcast %cst_24 : f32 to vector<8x64xf32>
    %69 = arith.select %67, %59, %68 : vector<8x64xi1>, vector<8x64xf32>
    %cst_25 = arith.constant 1.000000e+00 : f32
    %70 = vector.broadcast %cst_25 : f32 to vector<8x64xf32>
    %71 = arith.subf %70, %69 : vector<8x64xf32>
    %72 = arith.mulf %71, %65 : vector<8x64xf32>
    %73 = arith.mulf %69, %43 : vector<8x64xf32>
    %74 = arith.addf %72, %73 : vector<8x64xf32>
    %c2_i32 = arith.constant 2 : i32
    %c8_i32_26 = arith.constant 8 : i32
    %75 = arith.muli %c2_i32, %c8_i32_26 : i32
    %76 = tpu.assume_multiple %75, 8 : i32
    %77 = arith.index_cast %76 : i32 to index
    %c0_27 = arith.constant 0 : index
    %78 = vector.load %arg14[%77, %c0_27] : memref<96x256xf32, #tpu.memory_space<vmem>>, vector<8x256xf32>
    %79 = arith.truncf %74 : vector<8x64xf32> to vector<8x64xbf16>
    %cst_28 = arith.constant dense<0.000000e+00> : vector<8x256xf32>
    %80 = tpu.matmul %79, %8, %cst_28 {dimension_numbers = #tpu.dot_dimension_numbers<[1], [0], [0], [1], [0, 0, 1, 1], [], []>} : vector<8x64xbf16>, vector<64x256xbf16>, vector<8x256xf32> -> vector<8x256xf32>
    %81 = vector.extract_strided_slice %78 {offsets = [0, 0], sizes = [8, 128], strides = [1, 1]} : vector<8x256xf32> to vector<8x128xf32>
    %82 = vector.extract_strided_slice %80 {offsets = [0, 0], sizes = [8, 128], strides = [1, 1]} : vector<8x256xf32> to vector<8x128xf32>
    %83 = arith.addf %81, %82 : vector<8x128xf32>
    %84 = arith.negf %83 : vector<8x128xf32>
    %85 = math.exp %84 : vector<8x128xf32>
    %cst_29 = arith.constant 1.000000e+00 : f32
    %86 = vector.broadcast %cst_29 : f32 to vector<8x128xf32>
    %87 = arith.addf %86, %85 : vector<8x128xf32>
    %88 = arith.divf %86, %87 : vector<8x128xf32>
    %89 = vector.extract_strided_slice %88 {offsets = [0, 0], sizes = [8, 64], strides = [1, 1]} : vector<8x128xf32> to vector<8x64xf32>
    %90 = vector.extract_strided_slice %88 {offsets = [0, 64], sizes = [8, 64], strides = [1, 1]} : vector<8x128xf32> to vector<8x64xf32>
    %91 = vector.extract_strided_slice %78 {offsets = [0, 128], sizes = [8, 64], strides = [1, 1]} : vector<8x256xf32> to vector<8x64xf32>
    %92 = vector.extract_strided_slice %80 {offsets = [0, 128], sizes = [8, 64], strides = [1, 1]} : vector<8x256xf32> to vector<8x64xf32>
    %93 = arith.addf %92, %11 : vector<8x64xf32>
    %94 = arith.mulf %89, %93 : vector<8x64xf32>
    %95 = arith.addf %91, %94 : vector<8x64xf32>
    %96 = math.tanh %95 : vector<8x64xf32>
    %97 = vector.broadcast %c2_i32 : i32 to vector<8x64xi32>
    %98 = arith.cmpi sgt, %7, %97 : vector<8x64xi32>
    %cst_30 = arith.constant 1.000000e+00 : f32
    %99 = vector.broadcast %cst_30 : f32 to vector<8x64xf32>
    %100 = arith.select %98, %90, %99 : vector<8x64xi1>, vector<8x64xf32>
    %cst_31 = arith.constant 1.000000e+00 : f32
    %101 = vector.broadcast %cst_31 : f32 to vector<8x64xf32>
    %102 = arith.subf %101, %100 : vector<8x64xf32>
    %103 = arith.mulf %102, %96 : vector<8x64xf32>
    %104 = arith.mulf %100, %74 : vector<8x64xf32>
    %105 = arith.addf %103, %104 : vector<8x64xf32>
    %c3_i32 = arith.constant 3 : i32
    %c8_i32_32 = arith.constant 8 : i32
    %106 = arith.muli %c3_i32, %c8_i32_32 : i32
    %107 = tpu.assume_multiple %106, 8 : i32
    %108 = arith.index_cast %107 : i32 to index
    %c0_33 = arith.constant 0 : index
    %109 = vector.load %arg14[%108, %c0_33] : memref<96x256xf32, #tpu.memory_space<vmem>>, vector<8x256xf32>
    %110 = arith.truncf %105 : vector<8x64xf32> to vector<8x64xbf16>
    %cst_34 = arith.constant dense<0.000000e+00> : vector<8x256xf32>
    %111 = tpu.matmul %110, %8, %cst_34 {dimension_numbers = #tpu.dot_dimension_numbers<[1], [0], [0], [1], [0, 0, 1, 1], [], []>} : vector<8x64xbf16>, vector<64x256xbf16>, vector<8x256xf32> -> vector<8x256xf32>
    %112 = vector.extract_strided_slice %109 {offsets = [0, 0], sizes = [8, 128], strides = [1, 1]} : vector<8x256xf32> to vector<8x128xf32>
    %113 = vector.extract_strided_slice %111 {offsets = [0, 0], sizes = [8, 128], strides = [1, 1]} : vector<8x256xf32> to vector<8x128xf32>
    %114 = arith.addf %112, %113 : vector<8x128xf32>
    %115 = arith.negf %114 : vector<8x128xf32>
    %116 = math.exp %115 : vector<8x128xf32>
    %cst_35 = arith.constant 1.000000e+00 : f32
    %117 = vector.broadcast %cst_35 : f32 to vector<8x128xf32>
    %118 = arith.addf %117, %116 : vector<8x128xf32>
    %119 = arith.divf %117, %118 : vector<8x128xf32>
    %120 = vector.extract_strided_slice %119 {offsets = [0, 0], sizes = [8, 64], strides = [1, 1]} : vector<8x128xf32> to vector<8x64xf32>
    %121 = vector.extract_strided_slice %119 {offsets = [0, 64], sizes = [8, 64], strides = [1, 1]} : vector<8x128xf32> to vector<8x64xf32>
    %122 = vector.extract_strided_slice %109 {offsets = [0, 128], sizes = [8, 64], strides = [1, 1]} : vector<8x256xf32> to vector<8x64xf32>
    %123 = vector.extract_strided_slice %111 {offsets = [0, 128], sizes = [8, 64], strides = [1, 1]} : vector<8x256xf32> to vector<8x64xf32>
    %124 = arith.addf %123, %11 : vector<8x64xf32>
    %125 = arith.mulf %120, %124 : vector<8x64xf32>
    %126 = arith.addf %122, %125 : vector<8x64xf32>
    %127 = math.tanh %126 : vector<8x64xf32>
    %128 = vector.broadcast %c3_i32 : i32 to vector<8x64xi32>
    %129 = arith.cmpi sgt, %7, %128 : vector<8x64xi32>
    %cst_36 = arith.constant 1.000000e+00 : f32
    %130 = vector.broadcast %cst_36 : f32 to vector<8x64xf32>
    %131 = arith.select %129, %121, %130 : vector<8x64xi1>, vector<8x64xf32>
    %cst_37 = arith.constant 1.000000e+00 : f32
    %132 = vector.broadcast %cst_37 : f32 to vector<8x64xf32>
    %133 = arith.subf %132, %131 : vector<8x64xf32>
    %134 = arith.mulf %133, %127 : vector<8x64xf32>
    %135 = arith.mulf %131, %105 : vector<8x64xf32>
    %136 = arith.addf %134, %135 : vector<8x64xf32>
    %c4_i32 = arith.constant 4 : i32
    %c8_i32_38 = arith.constant 8 : i32
    %137 = arith.muli %c4_i32, %c8_i32_38 : i32
    %138 = tpu.assume_multiple %137, 8 : i32
    %139 = arith.index_cast %138 : i32 to index
    %c0_39 = arith.constant 0 : index
    %140 = vector.load %arg14[%139, %c0_39] : memref<96x256xf32, #tpu.memory_space<vmem>>, vector<8x256xf32>
    %141 = arith.truncf %136 : vector<8x64xf32> to vector<8x64xbf16>
    %cst_40 = arith.constant dense<0.000000e+00> : vector<8x256xf32>
    %142 = tpu.matmul %141, %8, %cst_40 {dimension_numbers = #tpu.dot_dimension_numbers<[1], [0], [0], [1], [0, 0, 1, 1], [], []>} : vector<8x64xbf16>, vector<64x256xbf16>, vector<8x256xf32> -> vector<8x256xf32>
    %143 = vector.extract_strided_slice %140 {offsets = [0, 0], sizes = [8, 128], strides = [1, 1]} : vector<8x256xf32> to vector<8x128xf32>
    %144 = vector.extract_strided_slice %142 {offsets = [0, 0], sizes = [8, 128], strides = [1, 1]} : vector<8x256xf32> to vector<8x128xf32>
    %145 = arith.addf %143, %144 : vector<8x128xf32>
    %146 = arith.negf %145 : vector<8x128xf32>
    %147 = math.exp %146 : vector<8x128xf32>
    %cst_41 = arith.constant 1.000000e+00 : f32
    %148 = vector.broadcast %cst_41 : f32 to vector<8x128xf32>
    %149 = arith.addf %148, %147 : vector<8x128xf32>
    %150 = arith.divf %148, %149 : vector<8x128xf32>
    %151 = vector.extract_strided_slice %150 {offsets = [0, 0], sizes = [8, 64], strides = [1, 1]} : vector<8x128xf32> to vector<8x64xf32>
    %152 = vector.extract_strided_slice %150 {offsets = [0, 64], sizes = [8, 64], strides = [1, 1]} : vector<8x128xf32> to vector<8x64xf32>
    %153 = vector.extract_strided_slice %140 {offsets = [0, 128], sizes = [8, 64], strides = [1, 1]} : vector<8x256xf32> to vector<8x64xf32>
    %154 = vector.extract_strided_slice %142 {offsets = [0, 128], sizes = [8, 64], strides = [1, 1]} : vector<8x256xf32> to vector<8x64xf32>
    %155 = arith.addf %154, %11 : vector<8x64xf32>
    %156 = arith.mulf %151, %155 : vector<8x64xf32>
    %157 = arith.addf %153, %156 : vector<8x64xf32>
    %158 = math.tanh %157 : vector<8x64xf32>
    %159 = vector.broadcast %c4_i32 : i32 to vector<8x64xi32>
    %160 = arith.cmpi sgt, %7, %159 : vector<8x64xi32>
    %cst_42 = arith.constant 1.000000e+00 : f32
    %161 = vector.broadcast %cst_42 : f32 to vector<8x64xf32>
    %162 = arith.select %160, %152, %161 : vector<8x64xi1>, vector<8x64xf32>
    %cst_43 = arith.constant 1.000000e+00 : f32
    %163 = vector.broadcast %cst_43 : f32 to vector<8x64xf32>
    %164 = arith.subf %163, %162 : vector<8x64xf32>
    %165 = arith.mulf %164, %158 : vector<8x64xf32>
    %166 = arith.mulf %162, %136 : vector<8x64xf32>
    %167 = arith.addf %165, %166 : vector<8x64xf32>
    %c5_i32 = arith.constant 5 : i32
    %c8_i32_44 = arith.constant 8 : i32
    %168 = arith.muli %c5_i32, %c8_i32_44 : i32
    %169 = tpu.assume_multiple %168, 8 : i32
    %170 = arith.index_cast %169 : i32 to index
    %c0_45 = arith.constant 0 : index
    %171 = vector.load %arg14[%170, %c0_45] : memref<96x256xf32, #tpu.memory_space<vmem>>, vector<8x256xf32>
    %172 = arith.truncf %167 : vector<8x64xf32> to vector<8x64xbf16>
    %cst_46 = arith.constant dense<0.000000e+00> : vector<8x256xf32>
    %173 = tpu.matmul %172, %8, %cst_46 {dimension_numbers = #tpu.dot_dimension_numbers<[1], [0], [0], [1], [0, 0, 1, 1], [], []>} : vector<8x64xbf16>, vector<64x256xbf16>, vector<8x256xf32> -> vector<8x256xf32>
    %174 = vector.extract_strided_slice %171 {offsets = [0, 0], sizes = [8, 128], strides = [1, 1]} : vector<8x256xf32> to vector<8x128xf32>
    %175 = vector.extract_strided_slice %173 {offsets = [0, 0], sizes = [8, 128], strides = [1, 1]} : vector<8x256xf32> to vector<8x128xf32>
    %176 = arith.addf %174, %175 : vector<8x128xf32>
    %177 = arith.negf %176 : vector<8x128xf32>
    %178 = math.exp %177 : vector<8x128xf32>
    %cst_47 = arith.constant 1.000000e+00 : f32
    %179 = vector.broadcast %cst_47 : f32 to vector<8x128xf32>
    %180 = arith.addf %179, %178 : vector<8x128xf32>
    %181 = arith.divf %179, %180 : vector<8x128xf32>
    %182 = vector.extract_strided_slice %181 {offsets = [0, 0], sizes = [8, 64], strides = [1, 1]} : vector<8x128xf32> to vector<8x64xf32>
    %183 = vector.extract_strided_slice %181 {offsets = [0, 64], sizes = [8, 64], strides = [1, 1]} : vector<8x128xf32> to vector<8x64xf32>
    %184 = vector.extract_strided_slice %171 {offsets = [0, 128], sizes = [8, 64], strides = [1, 1]} : vector<8x256xf32> to vector<8x64xf32>
    %185 = vector.extract_strided_slice %173 {offsets = [0, 128], sizes = [8, 64], strides = [1, 1]} : vector<8x256xf32> to vector<8x64xf32>
    %186 = arith.addf %185, %11 : vector<8x64xf32>
    %187 = arith.mulf %182, %186 : vector<8x64xf32>
    %188 = arith.addf %184, %187 : vector<8x64xf32>
    %189 = math.tanh %188 : vector<8x64xf32>
    %190 = vector.broadcast %c5_i32 : i32 to vector<8x64xi32>
    %191 = arith.cmpi sgt, %7, %190 : vector<8x64xi32>
    %cst_48 = arith.constant 1.000000e+00 : f32
    %192 = vector.broadcast %cst_48 : f32 to vector<8x64xf32>
    %193 = arith.select %191, %183, %192 : vector<8x64xi1>, vector<8x64xf32>
    %cst_49 = arith.constant 1.000000e+00 : f32
    %194 = vector.broadcast %cst_49 : f32 to vector<8x64xf32>
    %195 = arith.subf %194, %193 : vector<8x64xf32>
    %196 = arith.mulf %195, %189 : vector<8x64xf32>
    %197 = arith.mulf %193, %167 : vector<8x64xf32>
    %198 = arith.addf %196, %197 : vector<8x64xf32>
    %c6_i32 = arith.constant 6 : i32
    %c8_i32_50 = arith.constant 8 : i32
    %199 = arith.muli %c6_i32, %c8_i32_50 : i32
    %200 = tpu.assume_multiple %199, 8 : i32
    %201 = arith.index_cast %200 : i32 to index
    %c0_51 = arith.constant 0 : index
    %202 = vector.load %arg14[%201, %c0_51] : memref<96x256xf32, #tpu.memory_space<vmem>>, vector<8x256xf32>
    %203 = arith.truncf %198 : vector<8x64xf32> to vector<8x64xbf16>
    %cst_52 = arith.constant dense<0.000000e+00> : vector<8x256xf32>
    %204 = tpu.matmul %203, %8, %cst_52 {dimension_numbers = #tpu.dot_dimension_numbers<[1], [0], [0], [1], [0, 0, 1, 1], [], []>} : vector<8x64xbf16>, vector<64x256xbf16>, vector<8x256xf32> -> vector<8x256xf32>
    %205 = vector.extract_strided_slice %202 {offsets = [0, 0], sizes = [8, 128], strides = [1, 1]} : vector<8x256xf32> to vector<8x128xf32>
    %206 = vector.extract_strided_slice %204 {offsets = [0, 0], sizes = [8, 128], strides = [1, 1]} : vector<8x256xf32> to vector<8x128xf32>
    %207 = arith.addf %205, %206 : vector<8x128xf32>
    %208 = arith.negf %207 : vector<8x128xf32>
    %209 = math.exp %208 : vector<8x128xf32>
    %cst_53 = arith.constant 1.000000e+00 : f32
    %210 = vector.broadcast %cst_53 : f32 to vector<8x128xf32>
    %211 = arith.addf %210, %209 : vector<8x128xf32>
    %212 = arith.divf %210, %211 : vector<8x128xf32>
    %213 = vector.extract_strided_slice %212 {offsets = [0, 0], sizes = [8, 64], strides = [1, 1]} : vector<8x128xf32> to vector<8x64xf32>
    %214 = vector.extract_strided_slice %212 {offsets = [0, 64], sizes = [8, 64], strides = [1, 1]} : vector<8x128xf32> to vector<8x64xf32>
    %215 = vector.extract_strided_slice %202 {offsets = [0, 128], sizes = [8, 64], strides = [1, 1]} : vector<8x256xf32> to vector<8x64xf32>
    %216 = vector.extract_strided_slice %204 {offsets = [0, 128], sizes = [8, 64], strides = [1, 1]} : vector<8x256xf32> to vector<8x64xf32>
    %217 = arith.addf %216, %11 : vector<8x64xf32>
    %218 = arith.mulf %213, %217 : vector<8x64xf32>
    %219 = arith.addf %215, %218 : vector<8x64xf32>
    %220 = math.tanh %219 : vector<8x64xf32>
    %221 = vector.broadcast %c6_i32 : i32 to vector<8x64xi32>
    %222 = arith.cmpi sgt, %7, %221 : vector<8x64xi32>
    %cst_54 = arith.constant 1.000000e+00 : f32
    %223 = vector.broadcast %cst_54 : f32 to vector<8x64xf32>
    %224 = arith.select %222, %214, %223 : vector<8x64xi1>, vector<8x64xf32>
    %cst_55 = arith.constant 1.000000e+00 : f32
    %225 = vector.broadcast %cst_55 : f32 to vector<8x64xf32>
    %226 = arith.subf %225, %224 : vector<8x64xf32>
    %227 = arith.mulf %226, %220 : vector<8x64xf32>
    %228 = arith.mulf %224, %198 : vector<8x64xf32>
    %229 = arith.addf %227, %228 : vector<8x64xf32>
    %c7_i32 = arith.constant 7 : i32
    %c8_i32_56 = arith.constant 8 : i32
    %230 = arith.muli %c7_i32, %c8_i32_56 : i32
    %231 = tpu.assume_multiple %230, 8 : i32
    %232 = arith.index_cast %231 : i32 to index
    %c0_57 = arith.constant 0 : index
    %233 = vector.load %arg14[%232, %c0_57] : memref<96x256xf32, #tpu.memory_space<vmem>>, vector<8x256xf32>
    %234 = arith.truncf %229 : vector<8x64xf32> to vector<8x64xbf16>
    %cst_58 = arith.constant dense<0.000000e+00> : vector<8x256xf32>
    %235 = tpu.matmul %234, %8, %cst_58 {dimension_numbers = #tpu.dot_dimension_numbers<[1], [0], [0], [1], [0, 0, 1, 1], [], []>} : vector<8x64xbf16>, vector<64x256xbf16>, vector<8x256xf32> -> vector<8x256xf32>
    %236 = vector.extract_strided_slice %233 {offsets = [0, 0], sizes = [8, 128], strides = [1, 1]} : vector<8x256xf32> to vector<8x128xf32>
    %237 = vector.extract_strided_slice %235 {offsets = [0, 0], sizes = [8, 128], strides = [1, 1]} : vector<8x256xf32> to vector<8x128xf32>
    %238 = arith.addf %236, %237 : vector<8x128xf32>
    %239 = arith.negf %238 : vector<8x128xf32>
    %240 = math.exp %239 : vector<8x128xf32>
    %cst_59 = arith.constant 1.000000e+00 : f32
    %241 = vector.broadcast %cst_59 : f32 to vector<8x128xf32>
    %242 = arith.addf %241, %240 : vector<8x128xf32>
    %243 = arith.divf %241, %242 : vector<8x128xf32>
    %244 = vector.extract_strided_slice %243 {offsets = [0, 0], sizes = [8, 64], strides = [1, 1]} : vector<8x128xf32> to vector<8x64xf32>
    %245 = vector.extract_strided_slice %243 {offsets = [0, 64], sizes = [8, 64], strides = [1, 1]} : vector<8x128xf32> to vector<8x64xf32>
    %246 = vector.extract_strided_slice %233 {offsets = [0, 128], sizes = [8, 64], strides = [1, 1]} : vector<8x256xf32> to vector<8x64xf32>
    %247 = vector.extract_strided_slice %235 {offsets = [0, 128], sizes = [8, 64], strides = [1, 1]} : vector<8x256xf32> to vector<8x64xf32>
    %248 = arith.addf %247, %11 : vector<8x64xf32>
    %249 = arith.mulf %244, %248 : vector<8x64xf32>
    %250 = arith.addf %246, %249 : vector<8x64xf32>
    %251 = math.tanh %250 : vector<8x64xf32>
    %252 = vector.broadcast %c7_i32 : i32 to vector<8x64xi32>
    %253 = arith.cmpi sgt, %7, %252 : vector<8x64xi32>
    %cst_60 = arith.constant 1.000000e+00 : f32
    %254 = vector.broadcast %cst_60 : f32 to vector<8x64xf32>
    %255 = arith.select %253, %245, %254 : vector<8x64xi1>, vector<8x64xf32>
    %cst_61 = arith.constant 1.000000e+00 : f32
    %256 = vector.broadcast %cst_61 : f32 to vector<8x64xf32>
    %257 = arith.subf %256, %255 : vector<8x64xf32>
    %258 = arith.mulf %257, %251 : vector<8x64xf32>
    %259 = arith.mulf %255, %229 : vector<8x64xf32>
    %260 = arith.addf %258, %259 : vector<8x64xf32>
    %c8_i32_62 = arith.constant 8 : i32
    %c8_i32_63 = arith.constant 8 : i32
    %261 = arith.muli %c8_i32_62, %c8_i32_63 : i32
    %262 = tpu.assume_multiple %261, 8 : i32
    %263 = arith.index_cast %262 : i32 to index
    %c0_64 = arith.constant 0 : index
    %264 = vector.load %arg14[%263, %c0_64] : memref<96x256xf32, #tpu.memory_space<vmem>>, vector<8x256xf32>
    %265 = arith.truncf %260 : vector<8x64xf32> to vector<8x64xbf16>
    %cst_65 = arith.constant dense<0.000000e+00> : vector<8x256xf32>
    %266 = tpu.matmul %265, %8, %cst_65 {dimension_numbers = #tpu.dot_dimension_numbers<[1], [0], [0], [1], [0, 0, 1, 1], [], []>} : vector<8x64xbf16>, vector<64x256xbf16>, vector<8x256xf32> -> vector<8x256xf32>
    %267 = vector.extract_strided_slice %264 {offsets = [0, 0], sizes = [8, 128], strides = [1, 1]} : vector<8x256xf32> to vector<8x128xf32>
    %268 = vector.extract_strided_slice %266 {offsets = [0, 0], sizes = [8, 128], strides = [1, 1]} : vector<8x256xf32> to vector<8x128xf32>
    %269 = arith.addf %267, %268 : vector<8x128xf32>
    %270 = arith.negf %269 : vector<8x128xf32>
    %271 = math.exp %270 : vector<8x128xf32>
    %cst_66 = arith.constant 1.000000e+00 : f32
    %272 = vector.broadcast %cst_66 : f32 to vector<8x128xf32>
    %273 = arith.addf %272, %271 : vector<8x128xf32>
    %274 = arith.divf %272, %273 : vector<8x128xf32>
    %275 = vector.extract_strided_slice %274 {offsets = [0, 0], sizes = [8, 64], strides = [1, 1]} : vector<8x128xf32> to vector<8x64xf32>
    %276 = vector.extract_strided_slice %274 {offsets = [0, 64], sizes = [8, 64], strides = [1, 1]} : vector<8x128xf32> to vector<8x64xf32>
    %277 = vector.extract_strided_slice %264 {offsets = [0, 128], sizes = [8, 64], strides = [1, 1]} : vector<8x256xf32> to vector<8x64xf32>
    %278 = vector.extract_strided_slice %266 {offsets = [0, 128], sizes = [8, 64], strides = [1, 1]} : vector<8x256xf32> to vector<8x64xf32>
    %279 = arith.addf %278, %11 : vector<8x64xf32>
    %280 = arith.mulf %275, %279 : vector<8x64xf32>
    %281 = arith.addf %277, %280 : vector<8x64xf32>
    %282 = math.tanh %281 : vector<8x64xf32>
    %283 = vector.broadcast %c8_i32_62 : i32 to vector<8x64xi32>
    %284 = arith.cmpi sgt, %7, %283 : vector<8x64xi32>
    %cst_67 = arith.constant 1.000000e+00 : f32
    %285 = vector.broadcast %cst_67 : f32 to vector<8x64xf32>
    %286 = arith.select %284, %276, %285 : vector<8x64xi1>, vector<8x64xf32>
    %cst_68 = arith.constant 1.000000e+00 : f32
    %287 = vector.broadcast %cst_68 : f32 to vector<8x64xf32>
    %288 = arith.subf %287, %286 : vector<8x64xf32>
    %289 = arith.mulf %288, %282 : vector<8x64xf32>
    %290 = arith.mulf %286, %260 : vector<8x64xf32>
    %291 = arith.addf %289, %290 : vector<8x64xf32>
    %c9_i32 = arith.constant 9 : i32
    %c8_i32_69 = arith.constant 8 : i32
    %292 = arith.muli %c9_i32, %c8_i32_69 : i32
    %293 = tpu.assume_multiple %292, 8 : i32
    %294 = arith.index_cast %293 : i32 to index
    %c0_70 = arith.constant 0 : index
    %295 = vector.load %arg14[%294, %c0_70] : memref<96x256xf32, #tpu.memory_space<vmem>>, vector<8x256xf32>
    %296 = arith.truncf %291 : vector<8x64xf32> to vector<8x64xbf16>
    %cst_71 = arith.constant dense<0.000000e+00> : vector<8x256xf32>
    %297 = tpu.matmul %296, %8, %cst_71 {dimension_numbers = #tpu.dot_dimension_numbers<[1], [0], [0], [1], [0, 0, 1, 1], [], []>} : vector<8x64xbf16>, vector<64x256xbf16>, vector<8x256xf32> -> vector<8x256xf32>
    %298 = vector.extract_strided_slice %295 {offsets = [0, 0], sizes = [8, 128], strides = [1, 1]} : vector<8x256xf32> to vector<8x128xf32>
    %299 = vector.extract_strided_slice %297 {offsets = [0, 0], sizes = [8, 128], strides = [1, 1]} : vector<8x256xf32> to vector<8x128xf32>
    %300 = arith.addf %298, %299 : vector<8x128xf32>
    %301 = arith.negf %300 : vector<8x128xf32>
    %302 = math.exp %301 : vector<8x128xf32>
    %cst_72 = arith.constant 1.000000e+00 : f32
    %303 = vector.broadcast %cst_72 : f32 to vector<8x128xf32>
    %304 = arith.addf %303, %302 : vector<8x128xf32>
    %305 = arith.divf %303, %304 : vector<8x128xf32>
    %306 = vector.extract_strided_slice %305 {offsets = [0, 0], sizes = [8, 64], strides = [1, 1]} : vector<8x128xf32> to vector<8x64xf32>
    %307 = vector.extract_strided_slice %305 {offsets = [0, 64], sizes = [8, 64], strides = [1, 1]} : vector<8x128xf32> to vector<8x64xf32>
    %308 = vector.extract_strided_slice %295 {offsets = [0, 128], sizes = [8, 64], strides = [1, 1]} : vector<8x256xf32> to vector<8x64xf32>
    %309 = vector.extract_strided_slice %297 {offsets = [0, 128], sizes = [8, 64], strides = [1, 1]} : vector<8x256xf32> to vector<8x64xf32>
    %310 = arith.addf %309, %11 : vector<8x64xf32>
    %311 = arith.mulf %306, %310 : vector<8x64xf32>
    %312 = arith.addf %308, %311 : vector<8x64xf32>
    %313 = math.tanh %312 : vector<8x64xf32>
    %314 = vector.broadcast %c9_i32 : i32 to vector<8x64xi32>
    %315 = arith.cmpi sgt, %7, %314 : vector<8x64xi32>
    %cst_73 = arith.constant 1.000000e+00 : f32
    %316 = vector.broadcast %cst_73 : f32 to vector<8x64xf32>
    %317 = arith.select %315, %307, %316 : vector<8x64xi1>, vector<8x64xf32>
    %cst_74 = arith.constant 1.000000e+00 : f32
    %318 = vector.broadcast %cst_74 : f32 to vector<8x64xf32>
    %319 = arith.subf %318, %317 : vector<8x64xf32>
    %320 = arith.mulf %319, %313 : vector<8x64xf32>
    %321 = arith.mulf %317, %291 : vector<8x64xf32>
    %322 = arith.addf %320, %321 : vector<8x64xf32>
    %c10_i32 = arith.constant 10 : i32
    %c8_i32_75 = arith.constant 8 : i32
    %323 = arith.muli %c10_i32, %c8_i32_75 : i32
    %324 = tpu.assume_multiple %323, 8 : i32
    %325 = arith.index_cast %324 : i32 to index
    %c0_76 = arith.constant 0 : index
    %326 = vector.load %arg14[%325, %c0_76] : memref<96x256xf32, #tpu.memory_space<vmem>>, vector<8x256xf32>
    %327 = arith.truncf %322 : vector<8x64xf32> to vector<8x64xbf16>
    %cst_77 = arith.constant dense<0.000000e+00> : vector<8x256xf32>
    %328 = tpu.matmul %327, %8, %cst_77 {dimension_numbers = #tpu.dot_dimension_numbers<[1], [0], [0], [1], [0, 0, 1, 1], [], []>} : vector<8x64xbf16>, vector<64x256xbf16>, vector<8x256xf32> -> vector<8x256xf32>
    %329 = vector.extract_strided_slice %326 {offsets = [0, 0], sizes = [8, 128], strides = [1, 1]} : vector<8x256xf32> to vector<8x128xf32>
    %330 = vector.extract_strided_slice %328 {offsets = [0, 0], sizes = [8, 128], strides = [1, 1]} : vector<8x256xf32> to vector<8x128xf32>
    %331 = arith.addf %329, %330 : vector<8x128xf32>
    %332 = arith.negf %331 : vector<8x128xf32>
    %333 = math.exp %332 : vector<8x128xf32>
    %cst_78 = arith.constant 1.000000e+00 : f32
    %334 = vector.broadcast %cst_78 : f32 to vector<8x128xf32>
    %335 = arith.addf %334, %333 : vector<8x128xf32>
    %336 = arith.divf %334, %335 : vector<8x128xf32>
    %337 = vector.extract_strided_slice %336 {offsets = [0, 0], sizes = [8, 64], strides = [1, 1]} : vector<8x128xf32> to vector<8x64xf32>
    %338 = vector.extract_strided_slice %336 {offsets = [0, 64], sizes = [8, 64], strides = [1, 1]} : vector<8x128xf32> to vector<8x64xf32>
    %339 = vector.extract_strided_slice %326 {offsets = [0, 128], sizes = [8, 64], strides = [1, 1]} : vector<8x256xf32> to vector<8x64xf32>
    %340 = vector.extract_strided_slice %328 {offsets = [0, 128], sizes = [8, 64], strides = [1, 1]} : vector<8x256xf32> to vector<8x64xf32>
    %341 = arith.addf %340, %11 : vector<8x64xf32>
    %342 = arith.mulf %337, %341 : vector<8x64xf32>
    %343 = arith.addf %339, %342 : vector<8x64xf32>
    %344 = math.tanh %343 : vector<8x64xf32>
    %345 = vector.broadcast %c10_i32 : i32 to vector<8x64xi32>
    %346 = arith.cmpi sgt, %7, %345 : vector<8x64xi32>
    %cst_79 = arith.constant 1.000000e+00 : f32
    %347 = vector.broadcast %cst_79 : f32 to vector<8x64xf32>
    %348 = arith.select %346, %338, %347 : vector<8x64xi1>, vector<8x64xf32>
    %cst_80 = arith.constant 1.000000e+00 : f32
    %349 = vector.broadcast %cst_80 : f32 to vector<8x64xf32>
    %350 = arith.subf %349, %348 : vector<8x64xf32>
    %351 = arith.mulf %350, %344 : vector<8x64xf32>
    %352 = arith.mulf %348, %322 : vector<8x64xf32>
    %353 = arith.addf %351, %352 : vector<8x64xf32>
    %c11_i32 = arith.constant 11 : i32
    %c8_i32_81 = arith.constant 8 : i32
    %354 = arith.muli %c11_i32, %c8_i32_81 : i32
    %355 = tpu.assume_multiple %354, 8 : i32
    %356 = arith.index_cast %355 : i32 to index
    %c0_82 = arith.constant 0 : index
    %357 = vector.load %arg14[%356, %c0_82] : memref<96x256xf32, #tpu.memory_space<vmem>>, vector<8x256xf32>
    %358 = arith.truncf %353 : vector<8x64xf32> to vector<8x64xbf16>
    %cst_83 = arith.constant dense<0.000000e+00> : vector<8x256xf32>
    %359 = tpu.matmul %358, %8, %cst_83 {dimension_numbers = #tpu.dot_dimension_numbers<[1], [0], [0], [1], [0, 0, 1, 1], [], []>} : vector<8x64xbf16>, vector<64x256xbf16>, vector<8x256xf32> -> vector<8x256xf32>
    %360 = vector.extract_strided_slice %357 {offsets = [0, 0], sizes = [8, 128], strides = [1, 1]} : vector<8x256xf32> to vector<8x128xf32>
    %361 = vector.extract_strided_slice %359 {offsets = [0, 0], sizes = [8, 128], strides = [1, 1]} : vector<8x256xf32> to vector<8x128xf32>
    %362 = arith.addf %360, %361 : vector<8x128xf32>
    %363 = arith.negf %362 : vector<8x128xf32>
    %364 = math.exp %363 : vector<8x128xf32>
    %cst_84 = arith.constant 1.000000e+00 : f32
    %365 = vector.broadcast %cst_84 : f32 to vector<8x128xf32>
    %366 = arith.addf %365, %364 : vector<8x128xf32>
    %367 = arith.divf %365, %366 : vector<8x128xf32>
    %368 = vector.extract_strided_slice %367 {offsets = [0, 0], sizes = [8, 64], strides = [1, 1]} : vector<8x128xf32> to vector<8x64xf32>
    %369 = vector.extract_strided_slice %367 {offsets = [0, 64], sizes = [8, 64], strides = [1, 1]} : vector<8x128xf32> to vector<8x64xf32>
    %370 = vector.extract_strided_slice %357 {offsets = [0, 128], sizes = [8, 64], strides = [1, 1]} : vector<8x256xf32> to vector<8x64xf32>
    %371 = vector.extract_strided_slice %359 {offsets = [0, 128], sizes = [8, 64], strides = [1, 1]} : vector<8x256xf32> to vector<8x64xf32>
    %372 = arith.addf %371, %11 : vector<8x64xf32>
    %373 = arith.mulf %368, %372 : vector<8x64xf32>
    %374 = arith.addf %370, %373 : vector<8x64xf32>
    %375 = math.tanh %374 : vector<8x64xf32>
    %376 = vector.broadcast %c11_i32 : i32 to vector<8x64xi32>
    %377 = arith.cmpi sgt, %7, %376 : vector<8x64xi32>
    %cst_85 = arith.constant 1.000000e+00 : f32
    %378 = vector.broadcast %cst_85 : f32 to vector<8x64xf32>
    %379 = arith.select %377, %369, %378 : vector<8x64xi1>, vector<8x64xf32>
    %cst_86 = arith.constant 1.000000e+00 : f32
    %380 = vector.broadcast %cst_86 : f32 to vector<8x64xf32>
    %381 = arith.subf %380, %379 : vector<8x64xf32>
    %382 = arith.mulf %381, %375 : vector<8x64xf32>
    %383 = arith.mulf %379, %353 : vector<8x64xf32>
    %384 = arith.addf %382, %383 : vector<8x64xf32>
    %c12_i32 = arith.constant 12 : i32
    %c0_87 = arith.constant 0 : index
    %c0_88 = arith.constant 0 : index
    %385 = vector.load %arg7[%c0_87, %c0_88] : memref<64x32xf32, #tpu.memory_space<vmem>>, vector<64x32xf32>
    %cst_89 = arith.constant dense<0.000000e+00> : vector<8x32xf32>
    %386 = tpu.matmul %384, %385, %cst_89 {dimension_numbers = #tpu.dot_dimension_numbers<[1], [0], [0], [1], [0, 0, 1, 1], [], []>} : vector<8x64xf32>, vector<64x32xf32>, vector<8x32xf32> -> vector<8x32xf32>
    %c0_90 = arith.constant 0 : index
    %c0_91 = arith.constant 0 : index
    %387 = vector.load %arg8[%c0_90, %c0_91] : memref<1x32xf32, #tpu.memory_space<vmem>>, vector<1x32xf32>
    %388 = vector.broadcast %387 : vector<1x32xf32> to vector<8x32xf32>
    %389 = arith.addf %386, %388 : vector<8x32xf32>
    %cst_92 = arith.constant 0.000000e+00 : f32
    %390 = vector.broadcast %cst_92 : f32 to vector<8x32xf32>
    %391 = arith.maximumf %389, %390 : vector<8x32xf32>
    %c0_93 = arith.constant 0 : index
    %c0_94 = arith.constant 0 : index
    %392 = vector.load %arg9[%c0_93, %c0_94] : memref<1x32xf32, #tpu.memory_space<vmem>>, vector<1x32xf32>
    %393 = vector.broadcast %392 : vector<1x32xf32> to vector<8x32xf32>
    %394 = arith.mulf %391, %393 : vector<8x32xf32>
    %cst_95 = arith.constant dense<0.000000e+00> : vector<8xf32>
    %395 = vector.multi_reduction <add>, %394, %cst_95 [1] : vector<8x32xf32> to vector<8xf32>
    %396 = vector.shape_cast %395 : vector<8xf32> to vector<8x1xf32>
    %c0_96 = arith.constant 0 : index
    %c0_97 = arith.constant 0 : index
    %397 = vector.load %arg10[%c0_96, %c0_97] : memref<1x1xf32, #tpu.memory_space<vmem>>, vector<1x1xf32>
    %398 = vector.broadcast %397 : vector<1x1xf32> to vector<8x1xf32>
    %399 = arith.addf %396, %398 : vector<8x1xf32>
    %400 = arith.negf %399 : vector<8x1xf32>
    %401 = math.exp %400 : vector<8x1xf32>
    %cst_98 = arith.constant 1.000000e+00 : f32
    %402 = vector.broadcast %cst_98 : f32 to vector<8x1xf32>
    %403 = arith.addf %402, %401 : vector<8x1xf32>
    %404 = arith.divf %402, %403 : vector<8x1xf32>
    %405 = vector.extract_strided_slice %384 {offsets = [0, 0], sizes = [8, 32], strides = [1, 1]} : vector<8x64xf32> to vector<8x32xf32>
    %406 = vector.extract_strided_slice %384 {offsets = [0, 32], sizes = [8, 32], strides = [1, 1]} : vector<8x64xf32> to vector<8x32xf32>
    %407 = vector.broadcast %404 : vector<8x1xf32> to vector<8x32xf32>
    %408 = arith.mulf %405, %407 : vector<8x32xf32>
    %cst_99 = arith.constant 1.000000e+00 : f32
    %409 = vector.broadcast %cst_99 : f32 to vector<8x1xf32>
    %410 = arith.subf %409, %404 : vector<8x1xf32>
    %411 = vector.broadcast %410 : vector<8x1xf32> to vector<8x32xf32>
    %412 = arith.mulf %406, %411 : vector<8x32xf32>
    %413 = arith.addf %408, %412 : vector<8x32xf32>
    %c0_100 = arith.constant 0 : index
    %c0_101 = arith.constant 0 : index
    %414 = vector.load %arg11[%c0_100, %c0_101] : memref<32x16xf32, #tpu.memory_space<vmem>>, vector<32x16xf32>
    %cst_102 = arith.constant dense<0.000000e+00> : vector<8x16xf32>
    %415 = tpu.matmul %413, %414, %cst_102 {dimension_numbers = #tpu.dot_dimension_numbers<[1], [0], [0], [1], [0, 0, 1, 1], [], []>} : vector<8x32xf32>, vector<32x16xf32>, vector<8x16xf32> -> vector<8x16xf32>
    %c0_103 = arith.constant 0 : index
    %c0_104 = arith.constant 0 : index
    %416 = vector.load %arg12[%c0_103, %c0_104] : memref<1x16xf32, #tpu.memory_space<vmem>>, vector<1x16xf32>
    %417 = vector.broadcast %416 : vector<1x16xf32> to vector<8x16xf32>
    %418 = arith.addf %415, %417 : vector<8x16xf32>
    %c0_105 = arith.constant 0 : index
    %c0_106 = arith.constant 0 : index
    %419 = vector.load %arg13[%c0_105, %c0_106] : memref<8x16xf32, #tpu.memory_space<vmem>>, vector<8x16xf32>
    tpu.vector_store %arg13[%c0_105, %c0_106], %418 {strides = array<i32>} : memref<8x16xf32, #tpu.memory_space<vmem>>, vector<8x16xf32>,
    return
  }
}

</mosaic_0001>

<llo_original>
// kernel: token_char_forward.1
$region0: #{token_char_forward.1}
  #allocation0 [shape = 'u32[]', space=smem, size = 0x4, offset = 0x4, fixed_abs, tag = 'smem constant byte address 0x4 - core index']
  #allocation1 [shape = 'u32[144,128]{1,0:T(1,128)}', space=vmem, size = 0x12000, scoped, tag = 'internal scratch']
  #allocation2 [shape = 'f32[96,256]{1,0:T(8,128)}', space=vmem, size = 0x18000, scoped, tag = 'scratch operand']
  #allocation3 [shape = 'f32[1,1]{1,0:T(1,128)S(1)}', space=vmem, size = 0x200, scoped, tag = 'scoped memory for token_char_forward.1']
  %s0 = inlined_call_operand.vmem [shape: bf16[96,96], index: 0, kind: input, shape index: {}]
  %s1 = inlined_call_operand.vmem [shape: s32[8,64], index: 1, kind: input, shape index: {}]
  %s2 = inlined_call_operand.vmem [shape: f32[8,64], index: 2, kind: input, shape index: {}]
  %s3 = inlined_call_operand.vmem [shape: bf16[96,256], index: 3, kind: input, shape index: {}]
  %s4 = inlined_call_operand.vmem [shape: bf16[64,256], index: 4, kind: input, shape index: {}]
  %s5 = inlined_call_operand.vmem [shape: f32[1,256], index: 5, kind: input, shape index: {}]
  %s6 = inlined_call_operand.vmem [shape: f32[1,64], index: 6, kind: input, shape index: {}]
  %s7 = inlined_call_operand.vmem [shape: f32[64,32], index: 7, kind: input, shape index: {}]
  %s8 = inlined_call_operand.vmem [shape: f32[1,32], index: 8, kind: input, shape index: {}]
  %s9 = inlined_call_operand.vmem [shape: f32[1,32], index: 9, kind: input, shape index: {}]
  %s10 = inlined_call_operand.<no memory space> [shape: f32[1,1], index: 10, kind: input, shape index: {}]
  %s11 = inlined_call_operand.vmem [shape: f32[32,16], index: 11, kind: input, shape index: {}]
  %s12 = inlined_call_operand.vmem [shape: f32[1,16], index: 12, kind: input, shape index: {}]
  %s13 = inlined_call_operand.vmem [shape: f32[8,16], index: 13, kind: output, shape index: {}]
  %s14 = sld [smem:[#allocation0]]
  $region62: #{token_char_forward.1} parent=0
    _
  %s16 = ssub.s32 1, %s14
  %s17 = scalar_select 0, %s16, %s14
  %v18 = vstv %s10
  %19 = vst [vmem:[#allocation3] sm:$0x1] %v18
  // Predicated region
  $region2: #{token_char_forward.1} parent=0 // pred_check
    _
  $region3: #{token_char_forward.1} parent=0 // pred_check_branch
    %21 = sbr.rel (0) target = $region5
  $region4: #{token_char_forward.1} parent=0 // pred_region
    _
  $region5: #{token_char_forward.1} parent=0 // pred_fallthru
    _
  // Predicated region
  $region6: #{token_char_forward.1} parent=0 // pred_check
    _
  $region7: #{token_char_forward.1} parent=0 // pred_check_branch
    %23 = sbr.rel (0) target = $region9
  $region8: #{token_char_forward.1} parent=0 // pred_region
    _
  $region9: #{token_char_forward.1} parent=0 // pred_fallthru
    _
  // Predicated region
  $region10: #{token_char_forward.1} parent=0 // pred_check
    _
  $region11: #{token_char_forward.1} parent=0 // pred_check_branch
    %25 = sbr.rel (0) target = $region13
  $region12: #{token_char_forward.1} parent=0 // pred_region
    _
  $region13: #{token_char_forward.1} parent=0 // pred_fallthru
    _
  // Predicated region
  $region14: #{token_char_forward.1} parent=0 // pred_check
    _
  $region15: #{token_char_forward.1} parent=0 // pred_check_branch
    %27 = sbr.rel (0) target = $region17
  $region16: #{token_char_forward.1} parent=0 // pred_region
    _
  $region17: #{token_char_forward.1} parent=0 // pred_fallthru
    _
  // Predicated region
  $region18: #{token_char_forward.1} parent=0 // pred_check
    _
  $region19: #{token_char_forward.1} parent=0 // pred_check_branch
    %29 = sbr.rel (0) target = $region21
  $region20: #{token_char_forward.1} parent=0 // pred_region
    _
  $region21: #{token_char_forward.1} parent=0 // pred_fallthru
    _
  // Predicated region
  $region22: #{token_char_forward.1} parent=0 // pred_check
    _
  $region23: #{token_char_forward.1} parent=0 // pred_check_branch
    %31 = sbr.rel (0) target = $region25
  $region24: #{token_char_forward.1} parent=0 // pred_region
    _
  $region25: #{token_char_forward.1} parent=0 // pred_fallthru
    _
  // Predicated region
  $region26: #{token_char_forward.1} parent=0 // pred_check
    _
  $region27: #{token_char_forward.1} parent=0 // pred_check_branch
    %33 = sbr.rel (0) target = $region29
  $region28: #{token_char_forward.1} parent=0 // pred_region
    _
  $region29: #{token_char_forward.1} parent=0 // pred_fallthru
    _
  // Predicated region
  $region30: #{token_char_forward.1} parent=0 // pred_check
    _
  $region31: #{token_char_forward.1} parent=0 // pred_check_branch
    %35 = sbr.rel (0) target = $region33
  $region32: #{token_char_forward.1} parent=0 // pred_region
    _
  $region33: #{token_char_forward.1} parent=0 // pred_fallthru
    _
  // Predicated region
  $region34: #{token_char_forward.1} parent=0 // pred_check
    _
  $region35: #{token_char_forward.1} parent=0 // pred_check_branch
    %37 = sbr.rel (0) target = $region37
  $region36: #{token_char_forward.1} parent=0 // pred_region
    _
  $region37: #{token_char_forward.1} parent=0 // pred_fallthru
    _
  // Predicated region
  $region38: #{token_char_forward.1} parent=0 // pred_check
    _
  $region39: #{token_char_forward.1} parent=0 // pred_check_branch
    %39 = sbr.rel (0) target = $region41
  $region40: #{token_char_forward.1} parent=0 // pred_region
    _
  $region41: #{token_char_forward.1} parent=0 // pred_fallthru
    _
  // Predicated region
  $region42: #{token_char_forward.1} parent=0 // pred_check
    _
  $region43: #{token_char_forward.1} parent=0 // pred_check_branch
    %41 = sbr.rel (0) target = $region45
  $region44: #{token_char_forward.1} parent=0 // pred_region
    _
  $region45: #{token_char_forward.1} parent=0 // pred_fallthru
    _
  // Predicated region
  $region46: #{token_char_forward.1} parent=0 // pred_check
    _
  $region47: #{token_char_forward.1} parent=0 // pred_check_branch
    %43 = sbr.rel (0) target = $region49
  $region48: #{token_char_forward.1} parent=0 // pred_region
    _
  $region49: #{token_char_forward.1} parent=0 // pred_fallthru
    _
  // Predicated region
  $region50: #{token_char_forward.1} parent=0 // pred_check
    _
  $region51: #{token_char_forward.1} parent=0 // pred_check_branch
    %45 = sbr.rel (0) target = $region53
  $region52: #{token_char_forward.1} parent=0 // pred_region
    _
  $region53: #{token_char_forward.1} parent=0 // pred_fallthru
    _
  %v47 = vld [vmem:[%s0] sm:$0xf]
  %v48 = vld [vmem:[%s0 + $0x4] sm:$0xf]
  %v49 = vld [vmem:[%s0 + $0x8] sm:$0xf]
  %v50 = vld [vmem:[%s0 + $0xc] sm:$0xf]
  %v51 = vld [vmem:[%s0 + $0x10] sm:$0xf]
  %v52 = vld [vmem:[%s0 + $0x14] sm:$0xf]
  %v53 = vld [vmem:[%s0 + $0x18] sm:$0xf]
  %v54 = vld [vmem:[%s0 + $0x1c] sm:$0xf]
  %v55 = vld [vmem:[%s0 + $0x20] sm:$0xf]
  %v56 = vld [vmem:[%s0 + $0x24] sm:$0xf]
  %v57 = vld [vmem:[%s0 + $0x28] sm:$0xf]
  %v58 = vld [vmem:[%s0 + $0x2c] sm:$0xf]
  %v59 = vld [vmem:[%s3] sm:$0xff]
  %v60 = vld [vmem:[%s3 + $0x8] sm:$0xff]
  %v61 = vld [vmem:[%s3 + $0x10] sm:$0xff]
  %v62 = vld [vmem:[%s3 + $0x18] sm:$0xff]
  %v63 = vld [vmem:[%s3 + $0x20] sm:$0xff]
  %v64 = vld [vmem:[%s3 + $0x28] sm:$0xff]
  %v65 = vld [vmem:[%s3 + $0x30] sm:$0xff]
  %v66 = vld [vmem:[%s3 + $0x38] sm:$0xff]
  %v67 = vld [vmem:[%s3 + $0x40] sm:$0xff]
  %v68 = vld [vmem:[%s3 + $0x48] sm:$0xff]
  %v69 = vld [vmem:[%s3 + $0x50] sm:$0xff]
  %v70 = vld [vmem:[%s3 + $0x58] sm:$0xff]
  %v71 = vld [vmem:[%s5] sm:$0x3]
  %v73 = vlaneseq
  %v74 = vshrl.u32 %v73, 7
  %v75 = vsub.s32 0, %v74
  %v76 = vrot.slane %v71, %v75
  %v77 = vlaneseq
  %v78 = vshrl.u32 %v77, 7
  %v79 = vsub.s32 1, %v78
  %v80 = vrot.slane %v71, %v79
  %v95 = vunpack.c.l.b16 %v47
  %v96 = vunpack.c.l.b16 %v48
  %v97 = vunpack.c.l.b16 %v49
  %v98 = vunpack.c.l.b16 %v50
  %v99 = vunpack.c.l.b16 %v51
  %v100 = vunpack.c.l.b16 %v52
  %v101 = vunpack.c.l.b16 %v53
  %v102 = vunpack.c.l.b16 %v54
  %v103 = vunpack.c.l.b16 %v55
  %v104 = vunpack.c.l.b16 %v56
  %v105 = vunpack.c.l.b16 %v57
  %v106 = vunpack.c.l.b16 %v58
  %v107 = vpack.c.b16 %v96, %v95
  %v108 = vpack.c.b16 %v98, %v97
  %v109 = vpack.c.b16 %v100, %v99
  %v110 = vpack.c.b16 %v102, %v101
  %v111 = vpack.c.b16 %v104, %v103
  %v112 = vpack.c.b16 %v106, %v105
  %v125 = vunpack.c.l.b16 %v59
  %v126 = vunpack.c.h.b16 %v59
  %v127 = vunpack.c.l.b16 %v60
  %v128 = vunpack.c.h.b16 %v60
  %v129 = vunpack.c.l.b16 %v61
  %v130 = vunpack.c.h.b16 %v61
  %v131 = vunpack.c.l.b16 %v62
  %v132 = vunpack.c.h.b16 %v62
  %v133 = vunpack.c.l.b16 %v63
  %v134 = vunpack.c.h.b16 %v63
  %v135 = vunpack.c.l.b16 %v64
  %v136 = vunpack.c.h.b16 %v64
  %v137 = vunpack.c.l.b16 %v65
  %v138 = vunpack.c.h.b16 %v65
  %v139 = vunpack.c.l.b16 %v66
  %v140 = vunpack.c.h.b16 %v66
  %v141 = vunpack.c.l.b16 %v67
  %v142 = vunpack.c.h.b16 %v67
  %v143 = vunpack.c.l.b16 %v68
  %v144 = vunpack.c.h.b16 %v68
  %v145 = vunpack.c.l.b16 %v69
  %v146 = vunpack.c.h.b16 %v69
  %v147 = vunpack.c.l.b16 %v70
  %v148 = vunpack.c.h.b16 %v70
  %v149 = vpack.c.b16 %v127, %v125
  %v150 = vpack.c.b16 %v128, %v126
  %v151 = vpack.c.b16 %v131, %v129
  %v152 = vpack.c.b16 %v132, %v130
  %v153 = vpack.c.b16 %v135, %v133
  %v154 = vpack.c.b16 %v136, %v134
  %v155 = vpack.c.b16 %v139, %v137
  %v156 = vpack.c.b16 %v140, %v138
  %v157 = vpack.c.b16 %v143, %v141
  %v158 = vpack.c.b16 %v144, %v142
  %v159 = vpack.c.b16 %v147, %v145
  %v160 = vpack.c.b16 %v148, %v146
  %vm173 = vcmask 785408
  %v175 = vsel %vm173, %v107, 0
  %v178 = vsel %vm173, %v108, 0
  %v181 = vsel %vm173, %v109, 0
  %v184 = vsel %vm173, %v110, 0
  %v187 = vsel %vm173, %v111, 0
  %v190 = vsel %vm173, %v112, 0
  %192 = vmatprep.subr.bf16.mxu0 %v150
  %193 = vmatpush1.bf16.msra.mxu0 %v149
  %194 = vmatprep.subr.bf16.mxu0 %v152
  %195 = vmatpush1.bf16.msra.mxu0 %v151
  %196 = vmatprep.subr.bf16.mxu0 %v154
  %197 = vmatpush1.bf16.msra.mxu0 %v153
  %198 = vmatprep.subr.bf16.mxu0 %v156
  %199 = vmatpush1.bf16.msra.mxu0 %v155
  %200 = vmatprep.subr.bf16.mxu0 %v158
  %201 = vmatpush1.bf16.msra.mxu0 %v157
  %202 = vmatprep.subr.bf16.mxu0 %v160
  %203 = vmatpush1.bf16.msra.mxu0 %v159
  %204 = vmatprep.subr.bf16.mxu0 0
  %205 = vmatpush1.bf16.msra.mxu0 0
  %206 = vmatprep.subr.bf16.mxu0 0
  %207 = vmatpush1.bf16.msra.mxu0 0
  %208 = vmatprep.subr.bf16.mxu0 0
  %209 = vmatpush1.bf16.msra.mxu0 0
  %210 = vmatprep.subr.bf16.mxu0 0
  %211 = vmatpush1.bf16.msra.mxu0 0
  %212 = vmatprep.subr.bf16.mxu0 0
  %213 = vmatpush1.bf16.msra.mxu0 0
  %214 = vmatprep.subr.bf16.mxu0 0
  %215 = vmatpush1.bf16.msra.mxu0 0
  %216 = vmatprep.subr.bf16.mxu0 0
  %217 = vmatpush1.bf16.msra.mxu0 0
  %218 = vmatprep.subr.bf16.mxu0 0
  %219 = vmatpush1.bf16.msra.mxu0 0
  %220 = vmatprep.subr.bf16.mxu0 0
  %221 = vmatpush1.bf16.msra.mxu0 0
  %222 = vmatprep.subr.bf16.mxu0 0
  %223 = vmatpush1.bf16.msra.mxu0 0
  %224 = vmatprep.mubr.bf16.mxu0 0
  %225 = vmatmul.mubr.bf16.gmra.mrb[0].mxu0 %v175
  %v226 = vpop.f32.mrb[0].mxu0
  %v227 = vadd.f32 %v76, %v226
  %v228 = vpop.f32.mrb[0].mxu0
  %v229 = vadd.f32 %v80, %v228
  %v230 = vpop.f32.mrb[0].mxu0
  %v231 = vadd.f32 %v76, %v230
  %v232 = vpop.f32.mrb[0].mxu0
  %v233 = vadd.f32 %v80, %v232
  %234 = vmatprep.mubr.bf16.mxu0 0
  %235 = vmatmul.mubr.bf16.gmra.mrb[0].mxu0 %v178
  %v236 = vpop.f32.mrb[0].mxu0
  %v237 = vadd.f32 %v76, %v236
  %v238 = vpop.f32.mrb[0].mxu0
  %v239 = vadd.f32 %v80, %v238
  %v240 = vpop.f32.mrb[0].mxu0
  %v241 = vadd.f32 %v76, %v240
  %v242 = vpop.f32.mrb[0].mxu0
  %v243 = vadd.f32 %v80, %v242
  %244 = vmatprep.mubr.bf16.mxu0 0
  %245 = vmatmul.mubr.bf16.gmra.mrb[0].mxu0 %v181
  %v246 = vpop.f32.mrb[0].mxu0
  %v247 = vadd.f32 %v76, %v246
  %v248 = vpop.f32.mrb[0].mxu0
  %v249 = vadd.f32 %v80, %v248
  %v250 = vpop.f32.mrb[0].mxu0
  %v251 = vadd.f32 %v76, %v250
  %v252 = vpop.f32.mrb[0].mxu0
  %v253 = vadd.f32 %v80, %v252
  %254 = vmatprep.mubr.bf16.mxu0 0
  %255 = vmatmul.mubr.bf16.gmra.mrb[0].mxu0 %v184
  %v256 = vpop.f32.mrb[0].mxu0
  %v257 = vadd.f32 %v76, %v256
  %v258 = vpop.f32.mrb[0].mxu0
  %v259 = vadd.f32 %v80, %v258
  %v260 = vpop.f32.mrb[0].mxu0
  %v261 = vadd.f32 %v76, %v260
  %v262 = vpop.f32.mrb[0].mxu0
  %v263 = vadd.f32 %v80, %v262
  %264 = vmatprep.mubr.bf16.mxu0 0
  %265 = vmatmul.mubr.bf16.gmra.mrb[0].mxu0 %v187
  %v266 = vpop.f32.mrb[0].mxu0
  %v267 = vadd.f32 %v76, %v266
  %v268 = vpop.f32.mrb[0].mxu0
  %v269 = vadd.f32 %v80, %v268
  %v270 = vpop.f32.mrb[0].mxu0
  %v271 = vadd.f32 %v76, %v270
  %v272 = vpop.f32.mrb[0].mxu0
  %v273 = vadd.f32 %v80, %v272
  %274 = vmatprep.mubr.bf16.mxu0 0
  %275 = vmatmul.mubr.bf16.gmra.mrb[0].mxu0 %v190
  %v276 = vpop.f32.mrb[0].mxu0
  %v277 = vadd.f32 %v76, %v276
  %v278 = vpop.f32.mrb[0].mxu0
  %v279 = vadd.f32 %v80, %v278
  %v280 = vpop.f32.mrb[0].mxu0
  %v281 = vadd.f32 %v76, %v280
  %v282 = vpop.f32.mrb[0].mxu0
  %v283 = vadd.f32 %v80, %v282
  %284 = vdwg.mxu0
  %285 = vst [vmem:[#allocation2] sm:$0xff] %v227
  %286 = vst [vmem:[#allocation2 + $0x8] sm:$0xff] %v229
  %287 = vst [vmem:[#allocation2 + $0x10] sm:$0xff] %v231
  %288 = vst [vmem:[#allocation2 + $0x18] sm:$0xff] %v233
  %289 = vst [vmem:[#allocation2 + $0x20] sm:$0xff] %v237
  %290 = vst [vmem:[#allocation2 + $0x28] sm:$0xff] %v239
  %291 = vst [vmem:[#allocation2 + $0x30] sm:$0xff] %v241
  %292 = vst [vmem:[#allocation2 + $0x38] sm:$0xff] %v243
  %293 = vst [vmem:[#allocation2 + $0x40] sm:$0xff] %v247
  %294 = vst [vmem:[#allocation2 + $0x48] sm:$0xff] %v249
  %295 = vst [vmem:[#allocation2 + $0x50] sm:$0xff] %v251
  %296 = vst [vmem:[#allocation2 + $0x58] sm:$0xff] %v253
  %297 = vst [vmem:[#allocation2 + $0x60] sm:$0xff] %v257
  %298 = vst [vmem:[#allocation2 + $0x68] sm:$0xff] %v259
  %299 = vst [vmem:[#allocation2 + $0x70] sm:$0xff] %v261
  %300 = vst [vmem:[#allocation2 + $0x78] sm:$0xff] %v263
  %301 = vst [vmem:[#allocation2 + $0x80] sm:$0xff] %v267
  %302 = vst [vmem:[#allocation2 + $0x88] sm:$0xff] %v269
  %303 = vst [vmem:[#allocation2 + $0x90] sm:$0xff] %v271
  %304 = vst [vmem:[#allocation2 + $0x98] sm:$0xff] %v273
  %305 = vst [vmem:[#allocation2 + $0xa0] sm:$0xff] %v277
  %306 = vst [vmem:[#allocation2 + $0xa8] sm:$0xff] %v279
  %307 = vst [vmem:[#allocation2 + $0xb0] sm:$0xff] %v281
  %308 = vst [vmem:[#allocation2 + $0xb8] sm:$0xff] %v283
  %v309 = vld [vmem:[%s1] sm:$0xff]
  %v310 = vld [vmem:[%s4] sm:$0xff]
  %v311 = vld [vmem:[%s4 + $0x8] sm:$0xff]
  %v312 = vld [vmem:[%s4 + $0x10] sm:$0xff]
  %v313 = vld [vmem:[%s4 + $0x18] sm:$0xff]
  %v314 = vld [vmem:[%s4 + $0x20] sm:$0xff]
  %v315 = vld [vmem:[%s4 + $0x28] sm:$0xff]
  %v316 = vld [vmem:[%s4 + $0x30] sm:$0xff]
  %v317 = vld [vmem:[%s4 + $0x38] sm:$0xff]
  %v318 = vld [vmem:[%s6] sm:$0x1]
  %v320 = vlaneseq
  %v321 = vshrl.u32 %v320, 7
  %v322 = vsub.s32 0, %v321
  %v323 = vrot.slane %v318, %v322
  %v325 = vld [vmem:[%s2] sm:$0xff]
  %s326 = smul.u32 0, 2
  %s327 = smul.addr %s326, 8
  %s328 = scalar_lea.vmem [#allocation2], %s327
  %v329 = vld [vmem:[%s328] sm:$0xff]
  %v330 = vld [vmem:[%s328 + $0x8] sm:$0xff]
  %v331 = vpack.c.bf16 %v325, %v325
  %v340 = vunpack.c.l.b16 %v310
  %v341 = vunpack.c.h.b16 %v310
  %v342 = vunpack.c.l.b16 %v311
  %v343 = vunpack.c.h.b16 %v311
  %v344 = vunpack.c.l.b16 %v312
  %v345 = vunpack.c.h.b16 %v312
  %v346 = vunpack.c.l.b16 %v313
  %v347 = vunpack.c.h.b16 %v313
  %v348 = vunpack.c.l.b16 %v314
  %v349 = vunpack.c.h.b16 %v314
  %v350 = vunpack.c.l.b16 %v315
  %v351 = vunpack.c.h.b16 %v315
  %v352 = vunpack.c.l.b16 %v316
  %v353 = vunpack.c.h.b16 %v316
  %v354 = vunpack.c.l.b16 %v317
  %v355 = vunpack.c.h.b16 %v317
  %v356 = vpack.c.b16 %v342, %v340
  %v357 = vpack.c.b16 %v343, %v341
  %v358 = vpack.c.b16 %v346, %v344
  %v359 = vpack.c.b16 %v347, %v345
  %v360 = vpack.c.b16 %v350, %v348
  %v361 = vpack.c.b16 %v351, %v349
  %v362 = vpack.c.b16 %v354, %v352
  %v363 = vpack.c.b16 %v355, %v353
  %vm372 = vcmask 523264
  %v374 = vsel %vm372, %v331, 0
  %376 = vmatprep.subr.bf16.mxu0 %v357
  %377 = vmatpush1.bf16.msra.mxu0 %v356
  %378 = vmatprep.subr.bf16.mxu0 %v359
  %379 = vmatpush1.bf16.msra.mxu0 %v358
  %380 = vmatprep.subr.bf16.mxu0 %v361
  %381 = vmatpush1.bf16.msra.mxu0 %v360
  %382 = vmatprep.subr.bf16.mxu0 %v363
  %383 = vmatpush1.bf16.msra.mxu0 %v362
  %384 = vmatprep.subr.bf16.mxu0 0
  %385 = vmatpush1.bf16.msra.mxu0 0
  %386 = vmatprep.subr.bf16.mxu0 0
  %387 = vmatpush1.bf16.msra.mxu0 0
  %388 = vmatprep.subr.bf16.mxu0 0
  %389 = vmatpush1.bf16.msra.mxu0 0
  %390 = vmatprep.subr.bf16.mxu0 0
  %391 = vmatpush1.bf16.msra.mxu0 0
  %392 = vmatprep.subr.bf16.mxu0 0
  %393 = vmatpush1.bf16.msra.mxu0 0
  %394 = vmatprep.subr.bf16.mxu0 0
  %395 = vmatpush1.bf16.msra.mxu0 0
  %396 = vmatprep.subr.bf16.mxu0 0
  %397 = vmatpush1.bf16.msra.mxu0 0
  %398 = vmatprep.subr.bf16.mxu0 0
  %399 = vmatpush1.bf16.msra.mxu0 0
  %400 = vmatprep.subr.bf16.mxu0 0
  %401 = vmatpush1.bf16.msra.mxu0 0
  %402 = vmatprep.subr.bf16.mxu0 0
  %403 = vmatpush1.bf16.msra.mxu0 0
  %404 = vmatprep.subr.bf16.mxu0 0
  %405 = vmatpush1.bf16.msra.mxu0 0
  %406 = vmatprep.subr.bf16.mxu0 0
  %407 = vmatpush1.bf16.msra.mxu0 0
  %408 = vmatprep.mubr.bf16.mxu0 0
  %409 = vmatmul.mubr.bf16.gmra.mrb[0].mxu0 %v374
  %v410 = vpop.f32.mrb[0].mxu0
  %v411 = vadd.f32 0.0, %v410
  %v412 = vpop.f32.mrb[0].mxu0
  %v413 = vadd.f32 0.0, %v412
  %v414 = vpop.f32.mrb[0].mxu0
  %v415 = vpop.f32.mrb[0].mxu0
  %416 = vdwg.mxu0
  %v417 = vadd.f32 %v329, %v411
  %v418 = vxor.u32 %v417, 2147483648
  %v419 = vmul.f32 %v418, 1.442695
  %v420 = vpow.pop %v419
  %v421 = vadd.f32 %v420, 1.0
  %v422 = vrcp.pop %v421
  %v423 = vmul.f32 1.0, %v422
  %v424 = vadd.f32 %v413, %v323
  %v425 = vmul.f32 %v423, %v424
  %v426 = vadd.f32 %v330, %v425
  %v427 = vtanh.pop %v426
  %vm428 = vcmp.gt.s32.totalorder %v309, 0
  %430 = vrot.lane.b32.xlu0 %v423, 64
  %v431 = vpop.permute.xlu0 %430
  %v433 = vsel %vm428, %v431, 1.0
  %v434 = vsub.f32 1.0, %v433
  %v435 = vmul.f32 %v434, %v427
  %v436 = vmul.f32 %v433, %v325
  %v437 = vadd.f32 %v435, %v436
  %s438 = smul.u32 1, 2
  %s439 = smul.addr %s438, 8
  %s440 = scalar_lea.vmem [#allocation2], %s439
  %v441 = vld [vmem:[%s440] sm:$0xff]
  %v442 = vld [vmem:[%s440 + $0x8] sm:$0xff]
  %v443 = vpack.c.bf16 %v437, %v437
  %v445 = vsel %vm372, %v443, 0
  %447 = vmatprep.subr.bf16.mxu0 %v357
  %448 = vmatpush1.bf16.msra.mxu0 %v356
  %449 = vmatprep.subr.bf16.mxu0 %v359
  %450 = vmatpush1.bf16.msra.mxu0 %v358
  %451 = vmatprep.subr.bf16.mxu0 %v361
  %452 = vmatpush1.bf16.msra.mxu0 %v360
  %453 = vmatprep.subr.bf16.mxu0 %v363
  %454 = vmatpush1.bf16.msra.mxu0 %v362
  %455 = vmatprep.subr.bf16.mxu0 0
  %456 = vmatpush1.bf16.msra.mxu0 0
  %457 = vmatprep.subr.bf16.mxu0 0
  %458 = vmatpush1.bf16.msra.mxu0 0
  %459 = vmatprep.subr.bf16.mxu0 0
  %460 = vmatpush1.bf16.msra.mxu0 0
  %461 = vmatprep.subr.bf16.mxu0 0
  %462 = vmatpush1.bf16.msra.mxu0 0
  %463 = vmatprep.subr.bf16.mxu0 0
  %464 = vmatpush1.bf16.msra.mxu0 0
  %465 = vmatprep.subr.bf16.mxu0 0
  %466 = vmatpush1.bf16.msra.mxu0 0
  %467 = vmatprep.subr.bf16.mxu0 0
  %468 = vmatpush1.bf16.msra.mxu0 0
  %469 = vmatprep.subr.bf16.mxu0 0
  %470 = vmatpush1.bf16.msra.mxu0 0
  %471 = vmatprep.subr.bf16.mxu0 0
  %472 = vmatpush1.bf16.msra.mxu0 0
  %473 = vmatprep.subr.bf16.mxu0 0
  %474 = vmatpush1.bf16.msra.mxu0 0
  %475 = vmatprep.subr.bf16.mxu0 0
  %476 = vmatpush1.bf16.msra.mxu0 0
  %477 = vmatprep.subr.bf16.mxu0 0
  %478 = vmatpush1.bf16.msra.mxu0 0
  %479 = vmatprep.mubr.bf16.mxu0 0
  %480 = vmatmul.mubr.bf16.gmra.mrb[0].mxu0 %v445
  %v481 = vpop.f32.mrb[0].mxu0
  %v482 = vadd.f32 0.0, %v481
  %v483 = vpop.f32.mrb[0].mxu0
  %v484 = vadd.f32 0.0, %v483
  %v485 = vpop.f32.mrb[0].mxu0
  %v486 = vpop.f32.mrb[0].mxu0
  %487 = vdwg.mxu0
  %v488 = vadd.f32 %v441, %v482
  %v489 = vxor.u32 %v488, 2147483648
  %v490 = vmul.f32 %v489, 1.442695
  %v491 = vpow.pop %v490
  %v492 = vadd.f32 %v491, 1.0
  %v493 = vrcp.pop %v492
  %v494 = vmul.f32 1.0, %v493
  %v495 = vadd.f32 %v484, %v323
  %v496 = vmul.f32 %v494, %v495
  %v497 = vadd.f32 %v442, %v496
  %v498 = vtanh.pop %v497
  %vm499 = vcmp.gt.s32.totalorder %v309, 1
  %501 = vrot.lane.b32.xlu0 %v494, 64
  %v502 = vpop.permute.xlu0 %501
  %v504 = vsel %vm499, %v502, 1.0
  %v505 = vsub.f32 1.0, %v504
  %v506 = vmul.f32 %v505, %v498
  %v507 = vmul.f32 %v504, %v437
  %v508 = vadd.f32 %v506, %v507
  %s509 = smul.u32 2, 2
  %s510 = smul.addr %s509, 8
  %s511 = scalar_lea.vmem [#allocation2], %s510
  %v512 = vld [vmem:[%s511] sm:$0xff]
  %v513 = vld [vmem:[%s511 + $0x8] sm:$0xff]
  %v514 = vpack.c.bf16 %v508, %v508
  %v516 = vsel %vm372, %v514, 0
  %518 = vmatprep.subr.bf16.mxu0 %v357
  %519 = vmatpush1.bf16.msra.mxu0 %v356
  %520 = vmatprep.subr.bf16.mxu0 %v359
  %521 = vmatpush1.bf16.msra.mxu0 %v358
  %522 = vmatprep.subr.bf16.mxu0 %v361
  %523 = vmatpush1.bf16.msra.mxu0 %v360
  %524 = vmatprep.subr.bf16.mxu0 %v363
  %525 = vmatpush1.bf16.msra.mxu0 %v362
  %526 = vmatprep.subr.bf16.mxu0 0
  %527 = vmatpush1.bf16.msra.mxu0 0
  %528 = vmatprep.subr.bf16.mxu0 0
  %529 = vmatpush1.bf16.msra.mxu0 0
  %530 = vmatprep.subr.bf16.mxu0 0
  %531 = vmatpush1.bf16.msra.mxu0 0
  %532 = vmatprep.subr.bf16.mxu0 0
  %533 = vmatpush1.bf16.msra.mxu0 0
  %534 = vmatprep.subr.bf16.mxu0 0
  %535 = vmatpush1.bf16.msra.mxu0 0
  %536 = vmatprep.subr.bf16.mxu0 0
  %537 = vmatpush1.bf16.msra.mxu0 0
  %538 = vmatprep.subr.bf16.mxu0 0
  %539 = vmatpush1.bf16.msra.mxu0 0
  %540 = vmatprep.subr.bf16.mxu0 0
  %541 = vmatpush1.bf16.msra.mxu0 0
  %542 = vmatprep.subr.bf16.mxu0 0
  %543 = vmatpush1.bf16.msra.mxu0 0
  %544 = vmatprep.subr.bf16.mxu0 0
  %545 = vmatpush1.bf16.msra.mxu0 0
  %546 = vmatprep.subr.bf16.mxu0 0
  %547 = vmatpush1.bf16.msra.mxu0 0
  %548 = vmatprep.subr.bf16.mxu0 0
  %549 = vmatpush1.bf16.msra.mxu0 0
  %550 = vmatprep.mubr.bf16.mxu0 0
  %551 = vmatmul.mubr.bf16.gmra.mrb[0].mxu0 %v516
  %v552 = vpop.f32.mrb[0].mxu0
  %v553 = vadd.f32 0.0, %v552
  %v554 = vpop.f32.mrb[0].mxu0
  %v555 = vadd.f32 0.0, %v554
  %v556 = vpop.f32.mrb[0].mxu0
  %v557 = vpop.f32.mrb[0].mxu0
  %558 = vdwg.mxu0
  %v559 = vadd.f32 %v512, %v553
  %v560 = vxor.u32 %v559, 2147483648
  %v561 = vmul.f32 %v560, 1.442695
  %v562 = vpow.pop %v561
  %v563 = vadd.f32 %v562, 1.0
  %v564 = vrcp.pop %v563
  %v565 = vmul.f32 1.0, %v564
  %v566 = vadd.f32 %v555, %v323
  %v567 = vmul.f32 %v565, %v566
  %v568 = vadd.f32 %v513, %v567
  %v569 = vtanh.pop %v568
  %vm570 = vcmp.gt.s32.totalorder %v309, 2
  %572 = vrot.lane.b32.xlu0 %v565, 64
  %v573 = vpop.permute.xlu0 %572
  %v575 = vsel %vm570, %v573, 1.0
  %v576 = vsub.f32 1.0, %v575
  %v577 = vmul.f32 %v576, %v569
  %v578 = vmul.f32 %v575, %v508
  %v579 = vadd.f32 %v577, %v578
  %s580 = smul.u32 3, 2
  %s581 = smul.addr %s580, 8
  %s582 = scalar_lea.vmem [#allocation2], %s581
  %v583 = vld [vmem:[%s582] sm:$0xff]
  %v584 = vld [vmem:[%s582 + $0x8] sm:$0xff]
  %v585 = vpack.c.bf16 %v579, %v579
  %v587 = vsel %vm372, %v585, 0
  %589 = vmatprep.subr.bf16.mxu0 %v357
  %590 = vmatpush1.bf16.msra.mxu0 %v356
  %591 = vmatprep.subr.bf16.mxu0 %v359
  %592 = vmatpush1.bf16.msra.mxu0 %v358
  %593 = vmatprep.subr.bf16.mxu0 %v361
  %594 = vmatpush1.bf16.msra.mxu0 %v360
  %595 = vmatprep.subr.bf16.mxu0 %v363
  %596 = vmatpush1.bf16.msra.mxu0 %v362
  %597 = vmatprep.subr.bf16.mxu0 0
  %598 = vmatpush1.bf16.msra.mxu0 0
  %599 = vmatprep.subr.bf16.mxu0 0
  %600 = vmatpush1.bf16.msra.mxu0 0
  %601 = vmatprep.subr.bf16.mxu0 0
  %602 = vmatpush1.bf16.msra.mxu0 0
  %603 = vmatprep.subr.bf16.mxu0 0
  %604 = vmatpush1.bf16.msra.mxu0 0
  %605 = vmatprep.subr.bf16.mxu0 0
  %606 = vmatpush1.bf16.msra.mxu0 0
  %607 = vmatprep.subr.bf16.mxu0 0
  %608 = vmatpush1.bf16.msra.mxu0 0
  %609 = vmatprep.subr.bf16.mxu0 0
  %610 = vmatpush1.bf16.msra.mxu0 0
  %611 = vmatprep.subr.bf16.mxu0 0
  %612 = vmatpush1.bf16.msra.mxu0 0
  %613 = vmatprep.subr.bf16.mxu0 0
  %614 = vmatpush1.bf16.msra.mxu0 0
  %615 = vmatprep.subr.bf16.mxu0 0
  %616 = vmatpush1.bf16.msra.mxu0 0
  %617 = vmatprep.subr.bf16.mxu0 0
  %618 = vmatpush1.bf16.msra.mxu0 0
  %619 = vmatprep.subr.bf16.mxu0 0
  %620 = vmatpush1.bf16.msra.mxu0 0
  %621 = vmatprep.mubr.bf16.mxu0 0
  %622 = vmatmul.mubr.bf16.gmra.mrb[0].mxu0 %v587
  %v623 = vpop.f32.mrb[0].mxu0
  %v624 = vadd.f32 0.0, %v623
  %v625 = vpop.f32.mrb[0].mxu0
  %v626 = vadd.f32 0.0, %v625
  %v627 = vpop.f32.mrb[0].mxu0
  %v628 = vpop.f32.mrb[0].mxu0
  %629 = vdwg.mxu0
  %v630 = vadd.f32 %v583, %v624
  %v631 = vxor.u32 %v630, 2147483648
  %v632 = vmul.f32 %v631, 1.442695
  %v633 = vpow.pop %v632
  %v634 = vadd.f32 %v633, 1.0
  %v635 = vrcp.pop %v634
  %v636 = vmul.f32 1.0, %v635
  %v637 = vadd.f32 %v626, %v323
  %v638 = vmul.f32 %v636, %v637
  %v639 = vadd.f32 %v584, %v638
  %v640 = vtanh.pop %v639
  %vm641 = vcmp.gt.s32.totalorder %v309, 3
  %643 = vrot.lane.b32.xlu0 %v636, 64
  %v644 = vpop.permute.xlu0 %643
  %v646 = vsel %vm641, %v644, 1.0
  %v647 = vsub.f32 1.0, %v646
  %v648 = vmul.f32 %v647, %v640
  %v649 = vmul.f32 %v646, %v579
  %v650 = vadd.f32 %v648, %v649
  %s651 = smul.u32 4, 2
  %s652 = smul.addr %s651, 8
  %s653 = scalar_lea.vmem [#allocation2], %s652
  %v654 = vld [vmem:[%s653] sm:$0xff]
  %v655 = vld [vmem:[%s653 + $0x8] sm:$0xff]
  %v656 = vpack.c.bf16 %v650, %v650
  %v658 = vsel %vm372, %v656, 0
  %660 = vmatprep.subr.bf16.mxu0 %v357
  %661 = vmatpush1.bf16.msra.mxu0 %v356
  %662 = vmatprep.subr.bf16.mxu0 %v359
  %663 = vmatpush1.bf16.msra.mxu0 %v358
  %664 = vmatprep.subr.bf16.mxu0 %v361
  %665 = vmatpush1.bf16.msra.mxu0 %v360
  %666 = vmatprep.subr.bf16.mxu0 %v363
  %667 = vmatpush1.bf16.msra.mxu0 %v362
  %668 = vmatprep.subr.bf16.mxu0 0
  %669 = vmatpush1.bf16.msra.mxu0 0
  %670 = vmatprep.subr.bf16.mxu0 0
  %671 = vmatpush1.bf16.msra.mxu0 0
  %672 = vmatprep.subr.bf16.mxu0 0
  %673 = vmatpush1.bf16.msra.mxu0 0
  %674 = vmatprep.subr.bf16.mxu0 0
  %675 = vmatpush1.bf16.msra.mxu0 0
  %676 = vmatprep.subr.bf16.mxu0 0
  %677 = vmatpush1.bf16.msra.mxu0 0
  %678 = vmatprep.subr.bf16.mxu0 0
  %679 = vmatpush1.bf16.msra.mxu0 0
  %680 = vmatprep.subr.bf16.mxu0 0
  %681 = vmatpush1.bf16.msra.mxu0 0
  %682 = vmatprep.subr.bf16.mxu0 0
  %683 = vmatpush1.bf16.msra.mxu0 0
  %684 = vmatprep.subr.bf16.mxu0 0
  %685 = vmatpush1.bf16.msra.mxu0 0
  %686 = vmatprep.subr.bf16.mxu0 0
  %687 = vmatpush1.bf16.msra.mxu0 0
  %688 = vmatprep.subr.bf16.mxu0 0
  %689 = vmatpush1.bf16.msra.mxu0 0
  %690 = vmatprep.subr.bf16.mxu0 0
  %691 = vmatpush1.bf16.msra.mxu0 0
  %692 = vmatprep.mubr.bf16.mxu0 0
  %693 = vmatmul.mubr.bf16.gmra.mrb[0].mxu0 %v658
  %v694 = vpop.f32.mrb[0].mxu0
  %v695 = vadd.f32 0.0, %v694
  %v696 = vpop.f32.mrb[0].mxu0
  %v697 = vadd.f32 0.0, %v696
  %v698 = vpop.f32.mrb[0].mxu0
  %v699 = vpop.f32.mrb[0].mxu0
  %700 = vdwg.mxu0
  %v701 = vadd.f32 %v654, %v695
  %v702 = vxor.u32 %v701, 2147483648
  %v703 = vmul.f32 %v702, 1.442695
  %v704 = vpow.pop %v703
  %v705 = vadd.f32 %v704, 1.0
  %v706 = vrcp.pop %v705
  %v707 = vmul.f32 1.0, %v706
  %v708 = vadd.f32 %v697, %v323
  %v709 = vmul.f32 %v707, %v708
  %v710 = vadd.f32 %v655, %v709
  %v711 = vtanh.pop %v710
  %vm712 = vcmp.gt.s32.totalorder %v309, 4
  %714 = vrot.lane.b32.xlu0 %v707, 64
  %v715 = vpop.permute.xlu0 %714
  %v717 = vsel %vm712, %v715, 1.0
  %v718 = vsub.f32 1.0, %v717
  %v719 = vmul.f32 %v718, %v711
  %v720 = vmul.f32 %v717, %v650
  %v721 = vadd.f32 %v719, %v720
  %s722 = smul.u32 5, 2
  %s723 = smul.addr %s722, 8
  %s724 = scalar_lea.vmem [#allocation2], %s723
  %v725 = vld [vmem:[%s724] sm:$0xff]
  %v726 = vld [vmem:[%s724 + $0x8] sm:$0xff]
  %v727 = vpack.c.bf16 %v721, %v721
  %v729 = vsel %vm372, %v727, 0
  %731 = vmatprep.subr.bf16.mxu0 %v357
  %732 = vmatpush1.bf16.msra.mxu0 %v356
  %733 = vmatprep.subr.bf16.mxu0 %v359
  %734 = vmatpush1.bf16.msra.mxu0 %v358
  %735 = vmatprep.subr.bf16.mxu0 %v361
  %736 = vmatpush1.bf16.msra.mxu0 %v360
  %737 = vmatprep.subr.bf16.mxu0 %v363
  %738 = vmatpush1.bf16.msra.mxu0 %v362
  %739 = vmatprep.subr.bf16.mxu0 0
  %740 = vmatpush1.bf16.msra.mxu0 0
  %741 = vmatprep.subr.bf16.mxu0 0
  %742 = vmatpush1.bf16.msra.mxu0 0
  %743 = vmatprep.subr.bf16.mxu0 0
  %744 = vmatpush1.bf16.msra.mxu0 0
  %745 = vmatprep.subr.bf16.mxu0 0
  %746 = vmatpush1.bf16.msra.mxu0 0
  %747 = vmatprep.subr.bf16.mxu0 0
  %748 = vmatpush1.bf16.msra.mxu0 0
  %749 = vmatprep.subr.bf16.mxu0 0
  %750 = vmatpush1.bf16.msra.mxu0 0
  %751 = vmatprep.subr.bf16.mxu0 0
  %752 = vmatpush1.bf16.msra.mxu0 0
  %753 = vmatprep.subr.bf16.mxu0 0
  %754 = vmatpush1.bf16.msra.mxu0 0
  %755 = vmatprep.subr.bf16.mxu0 0
  %756 = vmatpush1.bf16.msra.mxu0 0
  %757 = vmatprep.subr.bf16.mxu0 0
  %758 = vmatpush1.bf16.msra.mxu0 0
  %759 = vmatprep.subr.bf16.mxu0 0
  %760 = vmatpush1.bf16.msra.mxu0 0
  %761 = vmatprep.subr.bf16.mxu0 0
  %762 = vmatpush1.bf16.msra.mxu0 0
  %763 = vmatprep.mubr.bf16.mxu0 0
  %764 = vmatmul.mubr.bf16.gmra.mrb[0].mxu0 %v729
  %v765 = vpop.f32.mrb[0].mxu0
  %v766 = vadd.f32 0.0, %v765
  %v767 = vpop.f32.mrb[0].mxu0
  %v768 = vadd.f32 0.0, %v767
  %v769 = vpop.f32.mrb[0].mxu0
  %v770 = vpop.f32.mrb[0].mxu0
  %771 = vdwg.mxu0
  %v772 = vadd.f32 %v725, %v766
  %v773 = vxor.u32 %v772, 2147483648
  %v774 = vmul.f32 %v773, 1.442695
  %v775 = vpow.pop %v774
  %v776 = vadd.f32 %v775, 1.0
  %v777 = vrcp.pop %v776
  %v778 = vmul.f32 1.0, %v777
  %v779 = vadd.f32 %v768, %v323
  %v780 = vmul.f32 %v778, %v779
  %v781 = vadd.f32 %v726, %v780
  %v782 = vtanh.pop %v781
  %vm783 = vcmp.gt.s32.totalorder %v309, 5
  %785 = vrot.lane.b32.xlu0 %v778, 64
  %v786 = vpop.permute.xlu0 %785
  %v788 = vsel %vm783, %v786, 1.0
  %v789 = vsub.f32 1.0, %v788
  %v790 = vmul.f32 %v789, %v782
  %v791 = vmul.f32 %v788, %v721
  %v792 = vadd.f32 %v790, %v791
  %s793 = smul.u32 6, 2
  %s794 = smul.addr %s793, 8
  %s795 = scalar_lea.vmem [#allocation2], %s794
  %v796 = vld [vmem:[%s795] sm:$0xff]
  %v797 = vld [vmem:[%s795 + $0x8] sm:$0xff]
  %v798 = vpack.c.bf16 %v792, %v792
  %v800 = vsel %vm372, %v798, 0
  %802 = vmatprep.subr.bf16.mxu0 %v357
  %803 = vmatpush1.bf16.msra.mxu0 %v356
  %804 = vmatprep.subr.bf16.mxu0 %v359
  %805 = vmatpush1.bf16.msra.mxu0 %v358
  %806 = vmatprep.subr.bf16.mxu0 %v361
  %807 = vmatpush1.bf16.msra.mxu0 %v360
  %808 = vmatprep.subr.bf16.mxu0 %v363
  %809 = vmatpush1.bf16.msra.mxu0 %v362
  %810 = vmatprep.subr.bf16.mxu0 0
  %811 = vmatpush1.bf16.msra.mxu0 0
  %812 = vmatprep.subr.bf16.mxu0 0
  %813 = vmatpush1.bf16.msra.mxu0 0
  %814 = vmatprep.subr.bf16.mxu0 0
  %815 = vmatpush1.bf16.msra.mxu0 0
  %816 = vmatprep.subr.bf16.mxu0 0
  %817 = vmatpush1.bf16.msra.mxu0 0
  %818 = vmatprep.subr.bf16.mxu0 0
  %819 = vmatpush1.bf16.msra.mxu0 0
  %820 = vmatprep.subr.bf16.mxu0 0
  %821 = vmatpush1.bf16.msra.mxu0 0
  %822 = vmatprep.subr.bf16.mxu0 0
  %823 = vmatpush1.bf16.msra.mxu0 0
  %824 = vmatprep.subr.bf16.mxu0 0
  %825 = vmatpush1.bf16.msra.mxu0 0
  %826 = vmatprep.subr.bf16.mxu0 0
  %827 = vmatpush1.bf16.msra.mxu0 0
  %828 = vmatprep.subr.bf16.mxu0 0
  %829 = vmatpush1.bf16.msra.mxu0 0
  %830 = vmatprep.subr.bf16.mxu0 0
  %831 = vmatpush1.bf16.msra.mxu0 0
  %832 = vmatprep.subr.bf16.mxu0 0
  %833 = vmatpush1.bf16.msra.mxu0 0
  %834 = vmatprep.mubr.bf16.mxu0 0
  %835 = vmatmul.mubr.bf16.gmra.mrb[0].mxu0 %v800
  %v836 = vpop.f32.mrb[0].mxu0
  %v837 = vadd.f32 0.0, %v836
  %v838 = vpop.f32.mrb[0].mxu0
  %v839 = vadd.f32 0.0, %v838
  %v840 = vpop.f32.mrb[0].mxu0
  %v841 = vpop.f32.mrb[0].mxu0
  %842 = vdwg.mxu0
  %v843 = vadd.f32 %v796, %v837
  %v844 = vxor.u32 %v843, 2147483648
  %v845 = vmul.f32 %v844, 1.442695
  %v846 = vpow.pop %v845
  %v847 = vadd.f32 %v846, 1.0
  %v848 = vrcp.pop %v847
  %v849 = vmul.f32 1.0, %v848
  %v850 = vadd.f32 %v839, %v323
  %v851 = vmul.f32 %v849, %v850
  %v852 = vadd.f32 %v797, %v851
  %v853 = vtanh.pop %v852
  %vm854 = vcmp.gt.s32.totalorder %v309, 6
  %856 = vrot.lane.b32.xlu0 %v849, 64
  %v857 = vpop.permute.xlu0 %856
  %v859 = vsel %vm854, %v857, 1.0
  %v860 = vsub.f32 1.0, %v859
  %v861 = vmul.f32 %v860, %v853
  %v862 = vmul.f32 %v859, %v792
  %v863 = vadd.f32 %v861, %v862
  %s864 = smul.u32 7, 2
  %s865 = smul.addr %s864, 8
  %s866 = scalar_lea.vmem [#allocation2], %s865
  %v867 = vld [vmem:[%s866] sm:$0xff]
  %v868 = vld [vmem:[%s866 + $0x8] sm:$0xff]
  %v869 = vpack.c.bf16 %v863, %v863
  %v871 = vsel %vm372, %v869, 0
  %873 = vmatprep.subr.bf16.mxu0 %v357
  %874 = vmatpush1.bf16.msra.mxu0 %v356
  %875 = vmatprep.subr.bf16.mxu0 %v359
  %876 = vmatpush1.bf16.msra.mxu0 %v358
  %877 = vmatprep.subr.bf16.mxu0 %v361
  %878 = vmatpush1.bf16.msra.mxu0 %v360
  %879 = vmatprep.subr.bf16.mxu0 %v363
  %880 = vmatpush1.bf16.msra.mxu0 %v362
  %881 = vmatprep.subr.bf16.mxu0 0
  %882 = vmatpush1.bf16.msra.mxu0 0
  %883 = vmatprep.subr.bf16.mxu0 0
  %884 = vmatpush1.bf16.msra.mxu0 0
  %885 = vmatprep.subr.bf16.mxu0 0
  %886 = vmatpush1.bf16.msra.mxu0 0
  %887 = vmatprep.subr.bf16.mxu0 0
  %888 = vmatpush1.bf16.msra.mxu0 0
  %889 = vmatprep.subr.bf16.mxu0 0
  %890 = vmatpush1.bf16.msra.mxu0 0
  %891 = vmatprep.subr.bf16.mxu0 0
  %892 = vmatpush1.bf16.msra.mxu0 0
  %893 = vmatprep.subr.bf16.mxu0 0
  %894 = vmatpush1.bf16.msra.mxu0 0
  %895 = vmatprep.subr.bf16.mxu0 0
  %896 = vmatpush1.bf16.msra.mxu0 0
  %897 = vmatprep.subr.bf16.mxu0 0
  %898 = vmatpush1.bf16.msra.mxu0 0
  %899 = vmatprep.subr.bf16.mxu0 0
  %900 = vmatpush1.bf16.msra.mxu0 0
  %901 = vmatprep.subr.bf16.mxu0 0
  %902 = vmatpush1.bf16.msra.mxu0 0
  %903 = vmatprep.subr.bf16.mxu0 0
  %904 = vmatpush1.bf16.msra.mxu0 0
  %905 = vmatprep.mubr.bf16.mxu0 0
  %906 = vmatmul.mubr.bf16.gmra.mrb[0].mxu0 %v871
  %v907 = vpop.f32.mrb[0].mxu0
  %v908 = vadd.f32 0.0, %v907
  %v909 = vpop.f32.mrb[0].mxu0
  %v910 = vadd.f32 0.0, %v909
  %v911 = vpop.f32.mrb[0].mxu0
  %v912 = vpop.f32.mrb[0].mxu0
  %913 = vdwg.mxu0
  %v914 = vadd.f32 %v867, %v908
  %v915 = vxor.u32 %v914, 2147483648
  %v916 = vmul.f32 %v915, 1.442695
  %v917 = vpow.pop %v916
  %v918 = vadd.f32 %v917, 1.0
  %v919 = vrcp.pop %v918
  %v920 = vmul.f32 1.0, %v919
  %v921 = vadd.f32 %v910, %v323
  %v922 = vmul.f32 %v920, %v921
  %v923 = vadd.f32 %v868, %v922
  %v924 = vtanh.pop %v923
  %vm925 = vcmp.gt.s32.totalorder %v309, 7
  %927 = vrot.lane.b32.xlu0 %v920, 64
  %v928 = vpop.permute.xlu0 %927
  %v930 = vsel %vm925, %v928, 1.0
  %v931 = vsub.f32 1.0, %v930
  %v932 = vmul.f32 %v931, %v924
  %v933 = vmul.f32 %v930, %v863
  %v934 = vadd.f32 %v932, %v933
  %s935 = smul.u32 8, 2
  %s936 = smul.addr %s935, 8
  %s937 = scalar_lea.vmem [#allocation2], %s936
  %v938 = vld [vmem:[%s937] sm:$0xff]
  %v939 = vld [vmem:[%s937 + $0x8] sm:$0xff]
  %v940 = vpack.c.bf16 %v934, %v934
  %v942 = vsel %vm372, %v940, 0
  %944 = vmatprep.subr.bf16.mxu0 %v357
  %945 = vmatpush1.bf16.msra.mxu0 %v356
  %946 = vmatprep.subr.bf16.mxu0 %v359
  %947 = vmatpush1.bf16.msra.mxu0 %v358
  %948 = vmatprep.subr.bf16.mxu0 %v361
  %949 = vmatpush1.bf16.msra.mxu0 %v360
  %950 = vmatprep.subr.bf16.mxu0 %v363
  %951 = vmatpush1.bf16.msra.mxu0 %v362
  %952 = vmatprep.subr.bf16.mxu0 0
  %953 = vmatpush1.bf16.msra.mxu0 0
  %954 = vmatprep.subr.bf16.mxu0 0
  %955 = vmatpush1.bf16.msra.mxu0 0
  %956 = vmatprep.subr.bf16.mxu0 0
  %957 = vmatpush1.bf16.msra.mxu0 0
  %958 = vmatprep.subr.bf16.mxu0 0
  %959 = vmatpush1.bf16.msra.mxu0 0
  %960 = vmatprep.subr.bf16.mxu0 0
  %961 = vmatpush1.bf16.msra.mxu0 0
  %962 = vmatprep.subr.bf16.mxu0 0
  %963 = vmatpush1.bf16.msra.mxu0 0
  %964 = vmatprep.subr.bf16.mxu0 0
  %965 = vmatpush1.bf16.msra.mxu0 0
  %966 = vmatprep.subr.bf16.mxu0 0
  %967 = vmatpush1.bf16.msra.mxu0 0
  %968 = vmatprep.subr.bf16.mxu0 0
  %969 = vmatpush1.bf16.msra.mxu0 0
  %970 = vmatprep.subr.bf16.mxu0 0
  %971 = vmatpush1.bf16.msra.mxu0 0
  %972 = vmatprep.subr.bf16.mxu0 0
  %973 = vmatpush1.bf16.msra.mxu0 0
  %974 = vmatprep.subr.bf16.mxu0 0
  %975 = vmatpush1.bf16.msra.mxu0 0
  %976 = vmatprep.mubr.bf16.mxu0 0
  %977 = vmatmul.mubr.bf16.gmra.mrb[0].mxu0 %v942
  %v978 = vpop.f32.mrb[0].mxu0
  %v979 = vadd.f32 0.0, %v978
  %v980 = vpop.f32.mrb[0].mxu0
  %v981 = vadd.f32 0.0, %v980
  %v982 = vpop.f32.mrb[0].mxu0
  %v983 = vpop.f32.mrb[0].mxu0
  %984 = vdwg.mxu0
  %v985 = vadd.f32 %v938, %v979
  %v986 = vxor.u32 %v985, 2147483648
  %v987 = vmul.f32 %v986, 1.442695
  %v988 = vpow.pop %v987
  %v989 = vadd.f32 %v988, 1.0
  %v990 = vrcp.pop %v989
  %v991 = vmul.f32 1.0, %v990
  %v992 = vadd.f32 %v981, %v323
  %v993 = vmul.f32 %v991, %v992
  %v994 = vadd.f32 %v939, %v993
  %v995 = vtanh.pop %v994
  %vm996 = vcmp.gt.s32.totalorder %v309, 8
  %998 = vrot.lane.b32.xlu0 %v991, 64
  %v999 = vpop.permute.xlu0 %998
  %v1001 = vsel %vm996, %v999, 1.0
  %v1002 = vsub.f32 1.0, %v1001
  %v1003 = vmul.f32 %v1002, %v995
  %v1004 = vmul.f32 %v1001, %v934
  %v1005 = vadd.f32 %v1003, %v1004
  %s1006 = smul.u32 9, 2
  %s1007 = smul.addr %s1006, 8
  %s1008 = scalar_lea.vmem [#allocation2], %s1007
  %v1009 = vld [vmem:[%s1008] sm:$0xff]
  %v1010 = vld [vmem:[%s1008 + $0x8] sm:$0xff]
  %v1011 = vpack.c.bf16 %v1005, %v1005
  %v1013 = vsel %vm372, %v1011, 0
  %1015 = vmatprep.subr.bf16.mxu0 %v357
  %1016 = vmatpush1.bf16.msra.mxu0 %v356
  %1017 = vmatprep.subr.bf16.mxu0 %v359
  %1018 = vmatpush1.bf16.msra.mxu0 %v358
  %1019 = vmatprep.subr.bf16.mxu0 %v361
  %1020 = vmatpush1.bf16.msra.mxu0 %v360
  %1021 = vmatprep.subr.bf16.mxu0 %v363
  %1022 = vmatpush1.bf16.msra.mxu0 %v362
  %1023 = vmatprep.subr.bf16.mxu0 0
  %1024 = vmatpush1.bf16.msra.mxu0 0
  %1025 = vmatprep.subr.bf16.mxu0 0
  %1026 = vmatpush1.bf16.msra.mxu0 0
  %1027 = vmatprep.subr.bf16.mxu0 0
  %1028 = vmatpush1.bf16.msra.mxu0 0
  %1029 = vmatprep.subr.bf16.mxu0 0
  %1030 = vmatpush1.bf16.msra.mxu0 0
  %1031 = vmatprep.subr.bf16.mxu0 0
  %1032 = vmatpush1.bf16.msra.mxu0 0
  %1033 = vmatprep.subr.bf16.mxu0 0
  %1034 = vmatpush1.bf16.msra.mxu0 0
  %1035 = vmatprep.subr.bf16.mxu0 0
  %1036 = vmatpush1.bf16.msra.mxu0 0
  %1037 = vmatprep.subr.bf16.mxu0 0
  %1038 = vmatpush1.bf16.msra.mxu0 0
  %1039 = vmatprep.subr.bf16.mxu0 0
  %1040 = vmatpush1.bf16.msra.mxu0 0
  %1041 = vmatprep.subr.bf16.mxu0 0
  %1042 = vmatpush1.bf16.msra.mxu0 0
  %1043 = vmatprep.subr.bf16.mxu0 0
  %1044 = vmatpush1.bf16.msra.mxu0 0
  %1045 = vmatprep.subr.bf16.mxu0 0
  %1046 = vmatpush1.bf16.msra.mxu0 0
  %1047 = vmatprep.mubr.bf16.mxu0 0
  %1048 = vmatmul.mubr.bf16.gmra.mrb[0].mxu0 %v1013
  %v1049 = vpop.f32.mrb[0].mxu0
  %v1050 = vadd.f32 0.0, %v1049
  %v1051 = vpop.f32.mrb[0].mxu0
  %v1052 = vadd.f32 0.0, %v1051
  %v1053 = vpop.f32.mrb[0].mxu0
  %v1054 = vpop.f32.mrb[0].mxu0
  %1055 = vdwg.mxu0
  %v1056 = vadd.f32 %v1009, %v1050
  %v1057 = vxor.u32 %v1056, 2147483648
  %v1058 = vmul.f32 %v1057, 1.442695
  %v1059 = vpow.pop %v1058
  %v1060 = vadd.f32 %v1059, 1.0
  %v1061 = vrcp.pop %v1060
  %v1062 = vmul.f32 1.0, %v1061
  %v1063 = vadd.f32 %v1052, %v323
  %v1064 = vmul.f32 %v1062, %v1063
  %v1065 = vadd.f32 %v1010, %v1064
  %v1066 = vtanh.pop %v1065
  %vm1067 = vcmp.gt.s32.totalorder %v309, 9
  %1069 = vrot.lane.b32.xlu0 %v1062, 64
  %v1070 = vpop.permute.xlu0 %1069
  %v1072 = vsel %vm1067, %v1070, 1.0
  %v1073 = vsub.f32 1.0, %v1072
  %v1074 = vmul.f32 %v1073, %v1066
  %v1075 = vmul.f32 %v1072, %v1005
  %v1076 = vadd.f32 %v1074, %v1075
  %s1077 = smul.u32 10, 2
  %s1078 = smul.addr %s1077, 8
  %s1079 = scalar_lea.vmem [#allocation2], %s1078
  %v1080 = vld [vmem:[%s1079] sm:$0xff]
  %v1081 = vld [vmem:[%s1079 + $0x8] sm:$0xff]
  %v1082 = vpack.c.bf16 %v1076, %v1076
  %v1084 = vsel %vm372, %v1082, 0
  %1086 = vmatprep.subr.bf16.mxu0 %v357
  %1087 = vmatpush1.bf16.msra.mxu0 %v356
  %1088 = vmatprep.subr.bf16.mxu0 %v359
  %1089 = vmatpush1.bf16.msra.mxu0 %v358
  %1090 = vmatprep.subr.bf16.mxu0 %v361
  %1091 = vmatpush1.bf16.msra.mxu0 %v360
  %1092 = vmatprep.subr.bf16.mxu0 %v363
  %1093 = vmatpush1.bf16.msra.mxu0 %v362
  %1094 = vmatprep.subr.bf16.mxu0 0
  %1095 = vmatpush1.bf16.msra.mxu0 0
  %1096 = vmatprep.subr.bf16.mxu0 0
  %1097 = vmatpush1.bf16.msra.mxu0 0
  %1098 = vmatprep.subr.bf16.mxu0 0
  %1099 = vmatpush1.bf16.msra.mxu0 0
  %1100 = vmatprep.subr.bf16.mxu0 0
  %1101 = vmatpush1.bf16.msra.mxu0 0
  %1102 = vmatprep.subr.bf16.mxu0 0
  %1103 = vmatpush1.bf16.msra.mxu0 0
  %1104 = vmatprep.subr.bf16.mxu0 0
  %1105 = vmatpush1.bf16.msra.mxu0 0
  %1106 = vmatprep.subr.bf16.mxu0 0
  %1107 = vmatpush1.bf16.msra.mxu0 0
  %1108 = vmatprep.subr.bf16.mxu0 0
  %1109 = vmatpush1.bf16.msra.mxu0 0
  %1110 = vmatprep.subr.bf16.mxu0 0
  %1111 = vmatpush1.bf16.msra.mxu0 0
  %1112 = vmatprep.subr.bf16.mxu0 0
  %1113 = vmatpush1.bf16.msra.mxu0 0
  %1114 = vmatprep.subr.bf16.mxu0 0
  %1115 = vmatpush1.bf16.msra.mxu0 0
  %1116 = vmatprep.subr.bf16.mxu0 0
  %1117 = vmatpush1.bf16.msra.mxu0 0
  %1118 = vmatprep.mubr.bf16.mxu0 0
  %1119 = vmatmul.mubr.bf16.gmra.mrb[0].mxu0 %v1084
  %v1120 = vpop.f32.mrb[0].mxu0
  %v1121 = vadd.f32 0.0, %v1120
  %v1122 = vpop.f32.mrb[0].mxu0
  %v1123 = vadd.f32 0.0, %v1122
  %v1124 = vpop.f32.mrb[0].mxu0
  %v1125 = vpop.f32.mrb[0].mxu0
  %1126 = vdwg.mxu0
  %v1127 = vadd.f32 %v1080, %v1121
  %v1128 = vxor.u32 %v1127, 2147483648
  %v1129 = vmul.f32 %v1128, 1.442695
  %v1130 = vpow.pop %v1129
  %v1131 = vadd.f32 %v1130, 1.0
  %v1132 = vrcp.pop %v1131
  %v1133 = vmul.f32 1.0, %v1132
  %v1134 = vadd.f32 %v1123, %v323
  %v1135 = vmul.f32 %v1133, %v1134
  %v1136 = vadd.f32 %v1081, %v1135
  %v1137 = vtanh.pop %v1136
  %vm1138 = vcmp.gt.s32.totalorder %v309, 10
  %1140 = vrot.lane.b32.xlu0 %v1133, 64
  %v1141 = vpop.permute.xlu0 %1140
  %v1143 = vsel %vm1138, %v1141, 1.0
  %v1144 = vsub.f32 1.0, %v1143
  %v1145 = vmul.f32 %v1144, %v1137
  %v1146 = vmul.f32 %v1143, %v1076
  %v1147 = vadd.f32 %v1145, %v1146
  %s1148 = smul.u32 11, 2
  %s1149 = smul.addr %s1148, 8
  %s1150 = scalar_lea.vmem [#allocation2], %s1149
  %v1151 = vld [vmem:[%s1150] sm:$0xff]
  %v1152 = vld [vmem:[%s1150 + $0x8] sm:$0xff]
  %v1153 = vpack.c.bf16 %v1147, %v1147
  %v1155 = vsel %vm372, %v1153, 0
  %1157 = vmatprep.subr.bf16.mxu0 %v357
  %1158 = vmatpush1.bf16.msra.mxu0 %v356
  %1159 = vmatprep.subr.bf16.mxu0 %v359
  %1160 = vmatpush1.bf16.msra.mxu0 %v358
  %1161 = vmatprep.subr.bf16.mxu0 %v361
  %1162 = vmatpush1.bf16.msra.mxu0 %v360
  %1163 = vmatprep.subr.bf16.mxu0 %v363
  %1164 = vmatpush1.bf16.msra.mxu0 %v362
  %1165 = vmatprep.subr.bf16.mxu0 0
  %1166 = vmatpush1.bf16.msra.mxu0 0
  %1167 = vmatprep.subr.bf16.mxu0 0
  %1168 = vmatpush1.bf16.msra.mxu0 0
  %1169 = vmatprep.subr.bf16.mxu0 0
  %1170 = vmatpush1.bf16.msra.mxu0 0
  %1171 = vmatprep.subr.bf16.mxu0 0
  %1172 = vmatpush1.bf16.msra.mxu0 0
  %1173 = vmatprep.subr.bf16.mxu0 0
  %1174 = vmatpush1.bf16.msra.mxu0 0
  %1175 = vmatprep.subr.bf16.mxu0 0
  %1176 = vmatpush1.bf16.msra.mxu0 0
  %1177 = vmatprep.subr.bf16.mxu0 0
  %1178 = vmatpush1.bf16.msra.mxu0 0
  %1179 = vmatprep.subr.bf16.mxu0 0
  %1180 = vmatpush1.bf16.msra.mxu0 0
  %1181 = vmatprep.subr.bf16.mxu0 0
  %1182 = vmatpush1.bf16.msra.mxu0 0
  %1183 = vmatprep.subr.bf16.mxu0 0
  %1184 = vmatpush1.bf16.msra.mxu0 0
  %1185 = vmatprep.subr.bf16.mxu0 0
  %1186 = vmatpush1.bf16.msra.mxu0 0
  %1187 = vmatprep.subr.bf16.mxu0 0
  %1188 = vmatpush1.bf16.msra.mxu0 0
  %1189 = vmatprep.mubr.bf16.mxu0 0
  %1190 = vmatmul.mubr.bf16.gmra.mrb[0].mxu0 %v1155
  %v1191 = vpop.f32.mrb[0].mxu0
  %v1192 = vadd.f32 0.0, %v1191
  %v1193 = vpop.f32.mrb[0].mxu0
  %v1194 = vadd.f32 0.0, %v1193
  %v1195 = vpop.f32.mrb[0].mxu0
  %v1196 = vpop.f32.mrb[0].mxu0
  %1197 = vdwg.mxu0
  %v1198 = vadd.f32 %v1151, %v1192
  %v1199 = vxor.u32 %v1198, 2147483648
  %v1200 = vmul.f32 %v1199, 1.442695
  %v1201 = vpow.pop %v1200
  %v1202 = vadd.f32 %v1201, 1.0
  %v1203 = vrcp.pop %v1202
  %v1204 = vmul.f32 1.0, %v1203
  %v1205 = vadd.f32 %v1194, %v323
  %v1206 = vmul.f32 %v1204, %v1205
  %v1207 = vadd.f32 %v1152, %v1206
  %v1208 = vtanh.pop %v1207
  %vm1209 = vcmp.gt.s32.totalorder %v309, 11
  %1211 = vrot.lane.b32.xlu0 %v1204, 64
  %v1212 = vpop.permute.xlu0 %1211
  %v1214 = vsel %vm1209, %v1212, 1.0
  %v1215 = vsub.f32 1.0, %v1214
  %v1216 = vmul.f32 %v1215, %v1208
  %v1217 = vmul.f32 %v1214, %v1147
  %v1218 = vadd.f32 %v1216, %v1217
  %v1219 = vld [vmem:[%s7] sm:$0xff]
  %v1220 = vld [vmem:[%s7 + $0x8] sm:$0xff]
  %v1221 = vld [vmem:[%s7 + $0x10] sm:$0xff]
  %v1222 = vld [vmem:[%s7 + $0x18] sm:$0xff]
  %v1223 = vld [vmem:[%s7 + $0x20] sm:$0xff]
  %v1224 = vld [vmem:[%s7 + $0x28] sm:$0xff]
  %v1225 = vld [vmem:[%s7 + $0x30] sm:$0xff]
  %v1226 = vld [vmem:[%s7 + $0x38] sm:$0xff]
  %v1227 = vld [vmem:[%s8] sm:$0x1]
  %v1229 = vlaneseq
  %v1230 = vshrl.u32 %v1229, 7
  %v1231 = vsub.s32 0, %v1230
  %v1232 = vrot.slane %v1227, %v1231
  %v1235 = vsel %vm372, %v1218, 0
  %1237 = vmatprep.subr.mxu0 0.0
  %1238 = vmatpush1.msra.mxu0 %v1219
  %1239 = vmatprep.subr.mxu0 0.0
  %1240 = vmatpush1.msra.mxu0 %v1220
  %1241 = vmatprep.subr.mxu0 0.0
  %1242 = vmatpush1.msra.mxu0 %v1221
  %1243 = vmatprep.subr.mxu0 0.0
  %1244 = vmatpush1.msra.mxu0 %v1222
  %1245 = vmatprep.subr.mxu0 0.0
  %1246 = vmatpush1.msra.mxu0 %v1223
  %1247 = vmatprep.subr.mxu0 0.0
  %1248 = vmatpush1.msra.mxu0 %v1224
  %1249 = vmatprep.subr.mxu0 0.0
  %1250 = vmatpush1.msra.mxu0 %v1225
  %1251 = vmatprep.subr.mxu0 0.0
  %1252 = vmatpush1.msra.mxu0 %v1226
  %1253 = vmatprep.subr.mxu0 0.0
  %1254 = vmatpush1.msra.mxu0 0.0
  %1255 = vmatprep.subr.mxu0 0.0
  %1256 = vmatpush1.msra.mxu0 0.0
  %1257 = vmatprep.subr.mxu0 0.0
  %1258 = vmatpush1.msra.mxu0 0.0
  %1259 = vmatprep.subr.mxu0 0.0
  %1260 = vmatpush1.msra.mxu0 0.0
  %1261 = vmatprep.subr.mxu0 0.0
  %1262 = vmatpush1.msra.mxu0 0.0
  %1263 = vmatprep.subr.mxu0 0.0
  %1264 = vmatpush1.msra.mxu0 0.0
  %1265 = vmatprep.subr.mxu0 0.0
  %1266 = vmatpush1.msra.mxu0 0.0
  %1267 = vmatprep.subr.mxu0 0.0
  %1268 = vmatpush1.msra.mxu0 0.0
  %1269 = vmatprep.subr.mxu0 0.0
  %1270 = vmatpush1.msra.mxu0 0.0
  %1271 = vmatprep.subr.mxu0 0.0
  %1272 = vmatpush1.msra.mxu0 0.0
  %1273 = vmatprep.subr.mxu0 0.0
  %1274 = vmatpush1.msra.mxu0 0.0
  %1275 = vmatprep.subr.mxu0 0.0
  %1276 = vmatpush1.msra.mxu0 0.0
  %1277 = vmatprep.subr.mxu0 0.0
  %1278 = vmatpush1.msra.mxu0 0.0
  %1279 = vmatprep.subr.mxu0 0.0
  %1280 = vmatpush1.msra.mxu0 0.0
  %1281 = vmatprep.subr.mxu0 0.0
  %1282 = vmatpush1.msra.mxu0 0.0
  %1283 = vmatprep.subr.mxu0 0.0
  %1284 = vmatpush1.msra.mxu0 0.0
  %1285 = vmatprep.subr.mxu0 0.0
  %1286 = vmatpush1.msra.mxu0 0.0
  %1287 = vmatprep.subr.mxu0 0.0
  %1288 = vmatpush1.msra.mxu0 0.0
  %1289 = vmatprep.subr.mxu0 0.0
  %1290 = vmatpush1.msra.mxu0 0.0
  %1291 = vmatprep.subr.mxu0 0.0
  %1292 = vmatpush1.msra.mxu0 0.0
  %1293 = vmatprep.subr.mxu0 0.0
  %1294 = vmatpush1.msra.mxu0 0.0
  %1295 = vmatprep.subr.mxu0 0.0
  %1296 = vmatpush1.msra.mxu0 0.0
  %1297 = vmatprep.subr.mxu0 0.0
  %1298 = vmatpush1.msra.mxu0 0.0
  %1299 = vmatprep.subr.mxu0 0.0
  %1300 = vmatpush1.msra.mxu0 0.0
  %1301 = vmatprep.mubr.f32.mxu0 0.0
  %1302 = vmatmul.mubr.f32.gmra.mrb[0].mxu0 %v1235
  %v1303 = vpop.f32.mrb[0].mxu0
  %v1304 = vadd.f32 %v1232, %v1303
  %v1305 = vpop.f32.mrb[0].mxu0
  %1306 = vdwg.mxu0
  %v1307 = vmax.f32 %v1304, 0.0
  %v1308 = vld [vmem:[%s9] sm:$0x1]
  %v1310 = vlaneseq
  %v1311 = vshrl.u32 %v1310, 7
  %v1312 = vsub.s32 0, %v1311
  %v1313 = vrot.slane %v1308, %v1312
  %v1315 = vmul.f32 %v1307, %v1313
  %vm1316 = vcmask 261120
  %v1317 = vsel %vm1316, %v1315, 0.0
  %1318 = vadd.xlane.f32.xlu0 %v1317
  %v1319 = vpop.xlane.xlu0 %1318
  %v1320 = vld [vmem:[#allocation3] sm:$0x1]
  %v1322 = vlaneseq
  %v1323 = vshrl.u32 %v1322, 7
  %v1324 = vsub.s32 0, %v1323
  %v1325 = vrot.slane %v1320, %v1324
  %v1327 = vadd.f32 %v1319, %v1325
  %v1328 = vxor.u32 %v1327, 2147483648
  %v1329 = vmul.f32 %v1328, 1.442695
  %v1330 = vpow.pop %v1329
  %v1331 = vadd.f32 %v1330, 1.0
  %v1332 = vrcp.pop %v1331
  %v1333 = vmul.f32 1.0, %v1332
  %1335 = vset.pattern.permute.xlu0 0
  %1336 = vperm.xlu0 %1335, %v1333
  %v1337 = vpop.permute.xlu0 %1336
  %v1339 = vmul.f32 %v1218, %v1337
  %v1340 = vsub.f32 1.0, %v1333
  %1342 = vset.pattern.permute.xlu0 0
  %1343 = vperm.xlu0 %1342, %v1340
  %v1344 = vpop.permute.xlu0 %1343
  %v1346 = vmul.f32 %v1218, %v1344
  %1348 = vrot.lane.b32.xlu0 %v1346, 96
  %v1349 = vpop.permute.xlu0 %1348
  %v1351 = vadd.f32 %v1339, %v1349
  %v1352 = vld [vmem:[%s11] sm:$0xff]
  %v1353 = vld [vmem:[%s11 + $0x8] sm:$0xff]
  %v1354 = vld [vmem:[%s11 + $0x10] sm:$0xff]
  %v1355 = vld [vmem:[%s11 + $0x18] sm:$0xff]
  %v1356 = vld [vmem:[%s12] sm:$0x1]
  %v1358 = vlaneseq
  %v1359 = vshrl.u32 %v1358, 7
  %v1360 = vsub.s32 0, %v1359
  %v1361 = vrot.slane %v1356, %v1360
  %v1364 = vsel %vm1316, %v1351, 0
  %1366 = vmatprep.subr.mxu0 0.0
  %1367 = vmatpush1.msra.mxu0 %v1352
  %1368 = vmatprep.subr.mxu0 0.0
  %1369 = vmatpush1.msra.mxu0 %v1353
  %1370 = vmatprep.subr.mxu0 0.0
  %1371 = vmatpush1.msra.mxu0 %v1354
  %1372 = vmatprep.subr.mxu0 0.0
  %1373 = vmatpush1.msra.mxu0 %v1355
  %1374 = vmatprep.subr.mxu0 0.0
  %1375 = vmatpush1.msra.mxu0 0.0
  %1376 = vmatprep.subr.mxu0 0.0
  %1377 = vmatpush1.msra.mxu0 0.0
  %1378 = vmatprep.subr.mxu0 0.0
  %1379 = vmatpush1.msra.mxu0 0.0
  %1380 = vmatprep.subr.mxu0 0.0
  %1381 = vmatpush1.msra.mxu0 0.0
  %1382 = vmatprep.subr.mxu0 0.0
  %1383 = vmatpush1.msra.mxu0 0.0
  %1384 = vmatprep.subr.mxu0 0.0
  %1385 = vmatpush1.msra.mxu0 0.0
  %1386 = vmatprep.subr.mxu0 0.0
  %1387 = vmatpush1.msra.mxu0 0.0
  %1388 = vmatprep.subr.mxu0 0.0
  %1389 = vmatpush1.msra.mxu0 0.0
  %1390 = vmatprep.subr.mxu0 0.0
  %1391 = vmatpush1.msra.mxu0 0.0
  %1392 = vmatprep.subr.mxu0 0.0
  %1393 = vmatpush1.msra.mxu0 0.0
  %1394 = vmatprep.subr.mxu0 0.0
  %1395 = vmatpush1.msra.mxu0 0.0
  %1396 = vmatprep.subr.mxu0 0.0
  %1397 = vmatpush1.msra.mxu0 0.0
  %1398 = vmatprep.subr.mxu0 0.0
  %1399 = vmatpush1.msra.mxu0 0.0
  %1400 = vmatprep.subr.mxu0 0.0
  %1401 = vmatpush1.msra.mxu0 0.0
  %1402 = vmatprep.subr.mxu0 0.0
  %1403 = vmatpush1.msra.mxu0 0.0
  %1404 = vmatprep.subr.mxu0 0.0
  %1405 = vmatpush1.msra.mxu0 0.0
  %1406 = vmatprep.subr.mxu0 0.0
  %1407 = vmatpush1.msra.mxu0 0.0
  %1408 = vmatprep.subr.mxu0 0.0
  %1409 = vmatpush1.msra.mxu0 0.0
  %1410 = vmatprep.subr.mxu0 0.0
  %1411 = vmatpush1.msra.mxu0 0.0
  %1412 = vmatprep.subr.mxu0 0.0
  %1413 = vmatpush1.msra.mxu0 0.0
  %1414 = vmatprep.subr.mxu0 0.0
  %1415 = vmatpush1.msra.mxu0 0.0
  %1416 = vmatprep.subr.mxu0 0.0
  %1417 = vmatpush1.msra.mxu0 0.0
  %1418 = vmatprep.subr.mxu0 0.0
  %1419 = vmatpush1.msra.mxu0 0.0
  %1420 = vmatprep.subr.mxu0 0.0
  %1421 = vmatpush1.msra.mxu0 0.0
  %1422 = vmatprep.subr.mxu0 0.0
  %1423 = vmatpush1.msra.mxu0 0.0
  %1424 = vmatprep.subr.mxu0 0.0
  %1425 = vmatpush1.msra.mxu0 0.0
  %1426 = vmatprep.subr.mxu0 0.0
  %1427 = vmatpush1.msra.mxu0 0.0
  %1428 = vmatprep.subr.mxu0 0.0
  %1429 = vmatpush1.msra.mxu0 0.0
  %1430 = vmatprep.mubr.f32.mxu0 0.0
  %1431 = vmatmul.mubr.f32.gmra.mrb[0].mxu0 %v1364
  %v1432 = vpop.f32.mrb[0].mxu0
  %v1433 = vadd.f32 %v1361, %v1432
  %v1434 = vpop.f32.mrb[0].mxu0
  %1435 = vdwg.mxu0
  %vm1436 = vcmask 130048
  %1437 = vst.msk [vmem:[%s13] sm:$0xff] %vm1436, %v1433
  // Predicated region
  $region54: #{token_char_forward.1} parent=0 // pred_check
    _
  $region55: #{token_char_forward.1} parent=0 // pred_check_branch
    %1439 = sbr.rel (0) target = $region57
  $region56: #{token_char_forward.1} parent=0 // pred_region
    _
  $region57: #{token_char_forward.1} parent=0 // pred_fallthru
    _
  // Predicated region
  $region58: #{token_char_forward.1} parent=0 // pred_check
    _
  $region59: #{token_char_forward.1} parent=0 // pred_check_branch
    %1441 = sbr.rel (0) target = $region61
  $region60: #{token_char_forward.1} parent=0 // pred_region
    _
  $region61: #{token_char_forward.1} parent=0 // pred_fallthru
    _

</llo_original>
